<compile_context>
chip_gen: v6e
topology: v6e:2x2x1
jax: 0.10.0
libtpu: 0.0.40
codegen_flags: <defaults>
</compile_context>

<pallas_src>
import functools

import jax
import jax.numpy as jnp
from jax.experimental import pallas as pl
from jax.experimental.pallas import tpu as pltpu

EPS = 1e-5
LANE = 128


# --------------------------------------------------------------------------
# Kernel: x_tile (TILE_B, D) -> out_tile (TILE_B, N_pad)
# Weights are BN-folded and bf16; biases stay f32.
# --------------------------------------------------------------------------
def _mlp_kernel(x_ref, w1_ref, b1_ref, w2_ref, b2_ref, w3_ref, b3_ref, o_ref):
    x = x_ref[...].astype(jnp.bfloat16)

    # Layer 1: (BN-folded) Linear + ReLU.  f32 accumulation / epilogue.
    h = jnp.dot(x, w1_ref[...], preferred_element_type=jnp.float32) + b1_ref[...]
    h = jnp.maximum(h, 0.0)

    # Layer 2: (BN-folded) Linear + ReLU.
    h = jnp.dot(h.astype(jnp.bfloat16), w2_ref[...],
                preferred_element_type=jnp.float32) + b2_ref[...]
    h = jnp.maximum(h, 0.0)

    # Layer 3: Linear padded to 128 output lanes (lane-dense matmul + store).
    out = jnp.dot(h.astype(jnp.bfloat16), w3_ref[...],
                  preferred_element_type=jnp.float32) + b3_ref[...]
    o_ref[...] = out.astype(o_ref.dtype)


def _fold_bn(w, b, gamma, beta, mean, var):
    """Fold eval-mode BatchNorm1d into the preceding Linear layer."""
    scale = gamma * jax.lax.rsqrt(var + EPS)          # (1, F)
    w_folded = w * scale                              # (in, F) * (1, F)
    b_folded = (b - mean) * scale + beta              # (1, F)
    return w_folded, b_folded


# --------------------------------------------------------------------------
# Wrapper
# --------------------------------------------------------------------------
def clinicalbert_classifier_forward(x, params, *, tile_b=None):
    """x: (B, input_dim) float32.  params: dict of weights (see init_params)."""
    B, in_dim = x.shape
    num_classes = params["w3"].shape[1]

    # --- Constant-fold BatchNorm into the linear layers (inference only).
    w1, b1 = _fold_bn(params["w1"], params["b1"], params["g1"],
                      params["beta1"], params["mean1"], params["var1"])
    w2, b2 = _fold_bn(params["w2"], params["b2"], params["g2"],
                      params["beta2"], params["mean2"], params["var2"])
    w3, b3 = params["w3"], params["b3"]

    # --- Pad the final layer to a full 128-lane output (lane-dense store).
    n_out = pl.cdiv(num_classes, LANE) * LANE
    w3p = jnp.pad(w3, ((0, 0), (0, n_out - num_classes)))
    b3p = jnp.pad(b3, ((0, 0), (0, n_out - num_classes)))

    # --- bf16 weights (halves weight HBM bytes), f32 biases.
    w1 = w1.astype(jnp.bfloat16)
    w2 = w2.astype(jnp.bfloat16)
    w3p = w3p.astype(jnp.bfloat16)
    b1 = b1.astype(jnp.float32)
    b2 = b2.astype(jnp.float32)
    b3p = b3p.astype(jnp.float32)

    h1, h2 = w1.shape[1], w2.shape[1]

    # --- Batch grid: tile rows; weights stay VMEM-resident across steps.
    if tile_b is None:
        tile_b = min(256, ((B + 7) // 8) * 8)        # sublane multiple, cap 256
    padded_b = pl.cdiv(B, tile_b) * tile_b
    if padded_b != B:
        x = jnp.pad(x, ((0, padded_b - B), (0, 0)))
    grid = (padded_b // tile_b,)

    flops = 2 * padded_b * (in_dim * h1 + h1 * h2 + h2 * n_out)
    bytes_accessed = (x.size * 4
                      + w1.size * 2 + w2.size * 2 + w3p.size * 2
                      + (b1.size + b2.size + b3p.size) * 4
                      + padded_b * n_out * 4)

    out = pl.pallas_call(
        _mlp_kernel,
        out_shape=jax.ShapeDtypeStruct((padded_b, n_out), jnp.float32),
        grid=grid,
        in_specs=[
            pl.BlockSpec((tile_b, in_dim), lambda i: (i, 0)),   # x tile (pipelined)
            pl.BlockSpec((in_dim, h1), lambda i: (0, 0)),       # resident weights
            pl.BlockSpec((1, h1), lambda i: (0, 0)),
            pl.BlockSpec((h1, h2), lambda i: (0, 0)),
            pl.BlockSpec((1, h2), lambda i: (0, 0)),
            pl.BlockSpec((h2, n_out), lambda i: (0, 0)),
            pl.BlockSpec((1, n_out), lambda i: (0, 0)),
        ],
        out_specs=pl.BlockSpec((tile_b, n_out), lambda i: (i, 0)),
        compiler_params=pltpu.CompilerParams(
            dimension_semantics=("parallel",),       # megacore-shardable on v7x
            vmem_limit_bytes=32 << 20,               # weights ~1.1MiB + tiles << 32MiB
        ),
        cost_estimate=pl.CostEstimate(
            flops=flops, transcendentals=0, bytes_accessed=bytes_accessed),
    )(x, w1, b1, w2, b2, w3p, b3p)

    return out[:B, :num_classes]


# --------------------------------------------------------------------------
# Parameters + pure-JAX reference
# --------------------------------------------------------------------------
def init_params(key, input_dim=768, num_classes=1):
    """Deterministic synthetic parameters matching the PyTorch module shapes.

    Linear weights stored as (in, out) = transpose of PyTorch's (out, in).
    BN vectors are stored as (1, F) for TPU-friendly 2-D layout.
    """
    ks = jax.random.split(key, 8)
    h1, h2 = 512, 256

    def lin(k, fin, fout):
        bound = 1.0 / jnp.sqrt(fin)
        kw, kb = jax.random.split(k)
        w = jax.random.uniform(kw, (fin, fout), jnp.float32, -bound, bound)
        b = jax.random.uniform(kb, (1, fout), jnp.float32, -bound, bound)
        return w, b

    w1, b1 = lin(ks[0], input_dim, h1)
    w2, b2 = lin(ks[1], h1, h2)
    w3, b3 = lin(ks[2], h2, num_classes)

    g1 = jnp.ones((1, h1), jnp.float32)
    beta1 = jnp.zeros((1, h1), jnp.float32)
    mean1 = 0.1 * jax.random.normal(ks[3], (1, h1), jnp.float32)
    var1 = 1.0 + 0.1 * jax.random.uniform(ks[4], (1, h1), jnp.float32)

    g2 = jnp.ones((1, h2), jnp.float32)
    beta2 = jnp.zeros((1, h2), jnp.float32)
    mean2 = 0.1 * jax.random.normal(ks[5], (1, h2), jnp.float32)
    var2 = 1.0 + 0.1 * jax.random.uniform(ks[6], (1, h2), jnp.float32)

    return dict(w1=w1, b1=b1, g1=g1, beta1=beta1, mean1=mean1, var1=var1,
                w2=w2, b2=b2, g2=g2, beta2=beta2, mean2=mean2, var2=var2,
                w3=w3, b3=b3)


def reference_forward(x, p):
    """Pure-JAX f32 reference (eval-mode BN, dropout identity)."""
    h = x @ p["w1"] + p["b1"]
    h = (h - p["mean1"]) * (p["g1"] / jnp.sqrt(p["var1"] + EPS)) + p["beta1"]
    h = jnp.maximum(h, 0.0)
    h = h @ p["w2"] + p["b2"]
    h = (h - p["mean2"]) * (p["g2"] / jnp.sqrt(p["var2"] + EPS)) + p["beta2"]
    h = jnp.maximum(h, 0.0)
    return h @ p["w3"] + p["b3"]


if __name__ == "__main__":
    key = jax.random.PRNGKey(0)
    k_x, k_p = jax.random.split(key)

    B, INPUT_DIM, NUM_CLASSES = 8, 768, 1
    x = jax.random.normal(k_x, (B, INPUT_DIM), jnp.float32)
    params = init_params(k_p, INPUT_DIM, NUM_CLASSES)

    fwd = jax.jit(functools.partial(clinicalbert_classifier_forward, params=params))
    out = jax.block_until_ready(fwd(x))
    ref = reference_forward(x, params)
    assert out.shape == (B, NUM_CLASSES)
    # bf16 weights vs f32 reference: loosen tolerance accordingly.
    assert jnp.allclose(out, ref, atol=5e-2, rtol=5e-2), "mismatch vs reference"

    # Also exercise the batch-padding path (B not a multiple of the tile).
    x2 = jax.random.normal(jax.random.PRNGKey(1), (13, INPUT_DIM), jnp.float32)
    out2 = jax.block_until_ready(clinicalbert_classifier_forward(x2, params))
    ref2 = reference_forward(x2, params)
    assert out2.shape == (13, NUM_CLASSES)
    assert jnp.allclose(out2, ref2, atol=5e-2, rtol=5e-2), "mismatch (padded batch)"

    # TODO(synk): training-mode BatchNorm (batch statistics) and Dropout masks
    # are not implemented; this kernel reproduces eval-mode forward semantics.
    print("KERNEL_OK")
</pallas_src>

<mosaic_0001>
module attributes {stable_mosaic.version = 11 : i64} {
  func.func @_mlp_kernel(%arg0: i32, %arg1: memref<8x768xf32, #tpu.memory_space<vmem>>, %arg2: memref<768x512xbf16, #tpu.memory_space<vmem>>, %arg3: memref<1x512xf32, #tpu.memory_space<vmem>>, %arg4: memref<512x256xbf16, #tpu.memory_space<vmem>>, %arg5: memref<1x256xf32, #tpu.memory_space<vmem>>, %arg6: memref<256x128xbf16, #tpu.memory_space<vmem>>, %arg7: memref<1x128xf32, #tpu.memory_space<vmem>>, %arg8: memref<8x128xf32, #tpu.memory_space<vmem>>) attributes {dimension_semantics = [#tpu.dimension_semantics<parallel>], iteration_bounds = array<i64: 1>, scalar_prefetch = 0 : i64, scratch_operands = 0 : i64, tpu.core_type = #tpu.core_type<tc>, window_params = [{transform_indices = @transform_0, window_bounds = array<i64: 8, 768>}, {pipeline_mode = #tpu.pipeline_mode<synchronous>, transform_indices = @transform_1, window_bounds = array<i64: 768, 512>}, {pipeline_mode = #tpu.pipeline_mode<synchronous>, transform_indices = @transform_2, window_bounds = array<i64: 1, 512>}, {pipeline_mode = #tpu.pipeline_mode<synchronous>, transform_indices = @transform_3, window_bounds = array<i64: 512, 256>}, {pipeline_mode = #tpu.pipeline_mode<synchronous>, transform_indices = @transform_4, window_bounds = array<i64: 1, 256>}, {pipeline_mode = #tpu.pipeline_mode<synchronous>, transform_indices = @transform_5, window_bounds = array<i64: 256, 128>}, {pipeline_mode = #tpu.pipeline_mode<synchronous>, transform_indices = @transform_6, window_bounds = array<i64: 1, 128>}, {transform_indices = @transform_7, window_bounds = array<i64: 8, 128>}]} {
    %c0 = arith.constant 0 : index
    %c0_0 = arith.constant 0 : index
    %0 = vector.load %arg1[%c0, %c0_0] : memref<8x768xf32, #tpu.memory_space<vmem>>, vector<8x768xf32>
    %1 = arith.truncf %0 : vector<8x768xf32> to vector<8x768xbf16>
    %c0_1 = arith.constant 0 : index
    %c0_2 = arith.constant 0 : index
    %2 = vector.load %arg2[%c0_1, %c0_2] : memref<768x512xbf16, #tpu.memory_space<vmem>>, vector<768x512xbf16>
    %cst = arith.constant dense<0.000000e+00> : vector<8x512xf32>
    %3 = tpu.matmul %1, %2, %cst {dimension_numbers = #tpu.dot_dimension_numbers<[1], [0], [0], [1], [0, 0, 1, 1], [], []>} : vector<8x768xbf16>, vector<768x512xbf16>, vector<8x512xf32> -> vector<8x512xf32>
    %c0_3 = arith.constant 0 : index
    %c0_4 = arith.constant 0 : index
    %4 = vector.load %arg3[%c0_3, %c0_4] : memref<1x512xf32, #tpu.memory_space<vmem>>, vector<1x512xf32>
    %5 = vector.broadcast %4 : vector<1x512xf32> to vector<8x512xf32>
    %6 = arith.addf %3, %5 : vector<8x512xf32>
    %cst_5 = arith.constant 0.000000e+00 : f32
    %7 = vector.broadcast %cst_5 : f32 to vector<8x512xf32>
    %8 = arith.maximumf %6, %7 : vector<8x512xf32>
    %9 = arith.truncf %8 : vector<8x512xf32> to vector<8x512xbf16>
    %c0_6 = arith.constant 0 : index
    %c0_7 = arith.constant 0 : index
    %10 = vector.load %arg4[%c0_6, %c0_7] : memref<512x256xbf16, #tpu.memory_space<vmem>>, vector<512x256xbf16>
    %cst_8 = arith.constant dense<0.000000e+00> : vector<8x256xf32>
    %11 = tpu.matmul %9, %10, %cst_8 {dimension_numbers = #tpu.dot_dimension_numbers<[1], [0], [0], [1], [0, 0, 1, 1], [], []>} : vector<8x512xbf16>, vector<512x256xbf16>, vector<8x256xf32> -> vector<8x256xf32>
    %c0_9 = arith.constant 0 : index
    %c0_10 = arith.constant 0 : index
    %12 = vector.load %arg5[%c0_9, %c0_10] : memref<1x256xf32, #tpu.memory_space<vmem>>, vector<1x256xf32>
    %13 = vector.broadcast %12 : vector<1x256xf32> to vector<8x256xf32>
    %14 = arith.addf %11, %13 : vector<8x256xf32>
    %cst_11 = arith.constant 0.000000e+00 : f32
    %15 = vector.broadcast %cst_11 : f32 to vector<8x256xf32>
    %16 = arith.maximumf %14, %15 : vector<8x256xf32>
    %17 = arith.truncf %16 : vector<8x256xf32> to vector<8x256xbf16>
    %c0_12 = arith.constant 0 : index
    %c0_13 = arith.constant 0 : index
    %18 = vector.load %arg6[%c0_12, %c0_13] : memref<256x128xbf16, #tpu.memory_space<vmem>>, vector<256x128xbf16>
    %cst_14 = arith.constant dense<0.000000e+00> : vector<8x128xf32>
    %19 = tpu.matmul %17, %18, %cst_14 {dimension_numbers = #tpu.dot_dimension_numbers<[1], [0], [0], [1], [0, 0, 1, 1], [], []>} : vector<8x256xbf16>, vector<256x128xbf16>, vector<8x128xf32> -> vector<8x128xf32>
    %c0_15 = arith.constant 0 : index
    %c0_16 = arith.constant 0 : index
    %20 = vector.load %arg7[%c0_15, %c0_16] : memref<1x128xf32, #tpu.memory_space<vmem>>, vector<1x128xf32>
    %21 = vector.broadcast %20 : vector<1x128xf32> to vector<8x128xf32>
    %22 = arith.addf %19, %21 : vector<8x128xf32>
    %c0_17 = arith.constant 0 : index
    %c0_18 = arith.constant 0 : index
    %23 = vector.load %arg8[%c0_17, %c0_18] : memref<8x128xf32, #tpu.memory_space<vmem>>, vector<8x128xf32>
    tpu.vector_store %arg8[%c0_17, %c0_18], %22 {strides = array<i32>} : memref<8x128xf32, #tpu.memory_space<vmem>>, vector<8x128xf32>,
    return
  }
  func.func @transform_0(%arg0: i32) -> (i32, i32) {
    %c0_i32 = arith.constant 0 : i32
    %c0_i32_0 = arith.constant 0 : i32
    return %arg0, %c0_i32 : i32, i32
  }
  func.func @transform_1(%arg0: i32) -> (i32, i32) {
    %c0_i32 = arith.constant 0 : i32
    %c0_i32_0 = arith.constant 0 : i32
    %c0_i32_1 = arith.constant 0 : i32
    return %c0_i32, %c0_i32_0 : i32, i32
  }
  func.func @transform_2(%arg0: i32) -> (i32, i32) {
    %c0_i32 = arith.constant 0 : i32
    %c0_i32_0 = arith.constant 0 : i32
    %c0_i32_1 = arith.constant 0 : i32
    return %c0_i32, %c0_i32_0 : i32, i32
  }
  func.func @transform_3(%arg0: i32) -> (i32, i32) {
    %c0_i32 = arith.constant 0 : i32
    %c0_i32_0 = arith.constant 0 : i32
    %c0_i32_1 = arith.constant 0 : i32
    return %c0_i32, %c0_i32_0 : i32, i32
  }
  func.func @transform_4(%arg0: i32) -> (i32, i32) {
    %c0_i32 = arith.constant 0 : i32
    %c0_i32_0 = arith.constant 0 : i32
    %c0_i32_1 = arith.constant 0 : i32
    return %c0_i32, %c0_i32_0 : i32, i32
  }
  func.func @transform_5(%arg0: i32) -> (i32, i32) {
    %c0_i32 = arith.constant 0 : i32
    %c0_i32_0 = arith.constant 0 : i32
    %c0_i32_1 = arith.constant 0 : i32
    return %c0_i32, %c0_i32_0 : i32, i32
  }
  func.func @transform_6(%arg0: i32) -> (i32, i32) {
    %c0_i32 = arith.constant 0 : i32
    %c0_i32_0 = arith.constant 0 : i32
    %c0_i32_1 = arith.constant 0 : i32
    return %c0_i32, %c0_i32_0 : i32, i32
  }
  func.func @transform_7(%arg0: i32) -> (i32, i32) {
    %c0_i32 = arith.constant 0 : i32
    %c0_i32_0 = arith.constant 0 : i32
    return %arg0, %c0_i32 : i32, i32
  }
}

</mosaic_0001>

<llo_original>
// kernel: clinicalbert_classifier_forward.1
$region0: #{clinicalbert_classifier_forward.1}
  #allocation0 [shape = 'u32[]', space=smem, size = 0x4, offset = 0x4, fixed_abs, tag = 'smem constant byte address 0x4 - core index']
  #allocation1 [shape = 'u32[144,128]{1,0:T(1,128)}', space=vmem, size = 0x12000, scoped, tag = 'internal scratch']
  %s0 = inlined_call_operand.hbm [shape: f32[8,768], index: 0, kind: input, shape index: {}]
  %s1 = inlined_call_operand.hbm [shape: bf16[768,512], index: 1, kind: input, shape index: {}]
  %s2 = inlined_call_operand.hbm [shape: f32[1,512], index: 2, kind: input, shape index: {}]
  %s3 = inlined_call_operand.hbm [shape: bf16[512,256], index: 3, kind: input, shape index: {}]
  %s4 = inlined_call_operand.hbm [shape: f32[1,256], index: 4, kind: input, shape index: {}]
  %s5 = inlined_call_operand.hbm [shape: bf16[256,128], index: 5, kind: input, shape index: {}]
  %s6 = inlined_call_operand.vmem [shape: f32[1,128], index: 6, kind: input, shape index: {}]
  %s7 = inlined_call_operand.vmem [shape: f32[8,128], index: 7, kind: output, shape index: {}]
  %s8 = sld [smem:[#allocation0]]
  $region62: #{clinicalbert_classifier_forward.1} parent=0
    _
  %s10 = ssub.s32 1, %s8
  %s11 = scalar_select 0, %s10, %s8
  $region1: #{clinicalbert_classifier_forward.1} parent=0
    #allocation2 [shape = 'u8[24576]{0}', space=vmem, size = 0x6000, scoped, tag = 'input window, operand 0, single buffered']
    #allocation3 [shape = 's32[1]{0}', space=sflag, size = 0x4, scoped, tag = 'scoped memory for clinicalbert_classifier_forward.1']
    #allocation4 [shape = 'u8[786432]{0}', space=vmem, size = 0xc0000, scoped, tag = 'input window, operand 1, single buffered']
    #allocation5 [shape = 's32[1]{0}', space=sflag, size = 0x4, scoped, tag = 'scoped memory for clinicalbert_classifier_forward.1']
    #allocation6 [shape = 'u8[2048]{0}', space=vmem, size = 0x800, scoped, tag = 'input window, operand 2, single buffered']
    #allocation7 [shape = 'u8[262144]{0}', space=vmem, size = 0x40000, scoped, tag = 'input window, operand 3, single buffered']
    #allocation8 [shape = 's32[1]{0}', space=sflag, size = 0x4, scoped, tag = 'scoped memory for clinicalbert_classifier_forward.1']
    #allocation9 [shape = 'u8[1024]{0}', space=vmem, size = 0x400, scoped, tag = 'input window, operand 4, single buffered']
    #allocation10 [shape = 'u8[65536]{0}', space=vmem, size = 0x10000, scoped, tag = 'input window, operand 5, single buffered']
    #allocation11 [shape = 's32[1]{0}', space=sflag, size = 0x4, scoped, tag = 'scoped memory for clinicalbert_classifier_forward.1']
    %12 = vsyncpa [#allocation3], 0
    %13 = vsyncpa [#allocation5], 0
    %14 = vsyncpa [#allocation8], 0
    %15 = vsyncpa [#allocation11], 0
    // Predicated region
    $region2: #{clinicalbert_classifier_forward.1} parent=1 // pred_check
      _
    $region3: #{clinicalbert_classifier_forward.1} parent=1 // pred_check_branch
      %17 = sbr.rel (0) target = $region5
    $region4: #{clinicalbert_classifier_forward.1} parent=1 // pred_region
      %s19 = ssub.s32 768, 768
      %20 = vsyncadd [#allocation3], %s19
      %s22 = sshll.u32 [#allocation2], 4
      %s23 = int_to_ptr.vmem [resolvable:$true] %s22
      %25 = dma.hbm_to_vmem [thread:$0]  %s0, 768, %s23, [#allocation3]
    $region5: #{clinicalbert_classifier_forward.1} parent=1 // pred_fallthru
      _
    // Predicated region
    $region6: #{clinicalbert_classifier_forward.1} parent=1 // pred_check
      _
    $region7: #{clinicalbert_classifier_forward.1} parent=1 // pred_check_branch
      %27 = sbr.rel (0) target = $region9
    $region8: #{clinicalbert_classifier_forward.1} parent=1 // pred_region
      %s29 = ssub.s32 24576, 24576
      %30 = vsyncadd [#allocation5], %s29
      %s31 = sshll.u32 [#allocation4], 4
      %s32 = int_to_ptr.vmem [resolvable:$true] %s31
      %37 = dma.hbm_to_vmem [thread:$0]  %s1, 24576, %s32, [#allocation5], 256, 256, 16
    $region9: #{clinicalbert_classifier_forward.1} parent=1 // pred_fallthru
      _
    // Predicated region
    $region10: #{clinicalbert_classifier_forward.1} parent=1 // pred_check
      _
    $region11: #{clinicalbert_classifier_forward.1} parent=1 // pred_check_branch
      %39 = sbr.rel (0) target = $region13
    $region12: #{clinicalbert_classifier_forward.1} parent=1 // pred_region
      %s41 = ssub.s32 64, 64
      %42 = vsyncadd [#allocation5], %s41
      %s44 = sshll.u32 [#allocation6], 4
      %s45 = int_to_ptr.vmem [resolvable:$true] %s44
      %47 = dma.hbm_to_vmem [thread:$0]  %s2, 64, %s45, [#allocation5]
    $region13: #{clinicalbert_classifier_forward.1} parent=1 // pred_fallthru
      _
    // Predicated region
    $region14: #{clinicalbert_classifier_forward.1} parent=1 // pred_check
      _
    $region15: #{clinicalbert_classifier_forward.1} parent=1 // pred_check_branch
      %49 = sbr.rel (0) target = $region17
    $region16: #{clinicalbert_classifier_forward.1} parent=1 // pred_region
      %s51 = ssub.s32 8192, 8192
      %52 = vsyncadd [#allocation8], %s51
      %s53 = sshll.u32 [#allocation7], 4
      %s54 = int_to_ptr.vmem [resolvable:$true] %s53
      %59 = dma.hbm_to_vmem [thread:$0]  %s3, 8192, %s54, [#allocation8], 128, 128, 8
    $region17: #{clinicalbert_classifier_forward.1} parent=1 // pred_fallthru
      _
    // Predicated region
    $region18: #{clinicalbert_classifier_forward.1} parent=1 // pred_check
      _
    $region19: #{clinicalbert_classifier_forward.1} parent=1 // pred_check_branch
      %61 = sbr.rel (0) target = $region21
    $region20: #{clinicalbert_classifier_forward.1} parent=1 // pred_region
      %s63 = ssub.s32 32, 32
      %64 = vsyncadd [#allocation8], %s63
      %s66 = sshll.u32 [#allocation9], 4
      %s67 = int_to_ptr.vmem [resolvable:$true] %s66
      %69 = dma.hbm_to_vmem [thread:$0]  %s4, 32, %s67, [#allocation8]
    $region21: #{clinicalbert_classifier_forward.1} parent=1 // pred_fallthru
      _
    // Predicated region
    $region22: #{clinicalbert_classifier_forward.1} parent=1 // pred_check
      _
    $region23: #{clinicalbert_classifier_forward.1} parent=1 // pred_check_branch
      %71 = sbr.rel (0) target = $region25
    $region24: #{clinicalbert_classifier_forward.1} parent=1 // pred_region
      %s73 = ssub.s32 2048, 2048
      %74 = vsyncadd [#allocation11], %s73
      %s75 = sshll.u32 [#allocation10], 4
      %s76 = int_to_ptr.vmem [resolvable:$true] %s75
      %81 = dma.hbm_to_vmem [thread:$0]  %s5, 2048, %s76, [#allocation11], 64, 64, 4
    $region25: #{clinicalbert_classifier_forward.1} parent=1 // pred_fallthru
      _
    // Predicated region
    $region26: #{clinicalbert_classifier_forward.1} parent=1 // pred_check
      _
    $region27: #{clinicalbert_classifier_forward.1} parent=1 // pred_check_branch
      %83 = sbr.rel (0) target = $region29
    $region28: #{clinicalbert_classifier_forward.1} parent=1 // pred_region
      _
    $region29: #{clinicalbert_classifier_forward.1} parent=1 // pred_fallthru
      _
    // Predicated region
    $region30: #{clinicalbert_classifier_forward.1} parent=1 // pred_check
      _
    $region31: #{clinicalbert_classifier_forward.1} parent=1 // pred_check_branch
      %85 = sbr.rel (0) target = $region33
    $region32: #{clinicalbert_classifier_forward.1} parent=1 // pred_region
      %86 = dma.done [#allocation3], 768
    $region33: #{clinicalbert_classifier_forward.1} parent=1 // pred_fallthru
      _
    // Predicated region
    $region34: #{clinicalbert_classifier_forward.1} parent=1 // pred_check
      _
    $region35: #{clinicalbert_classifier_forward.1} parent=1 // pred_check_branch
      %88 = sbr.rel (0) target = $region37
    $region36: #{clinicalbert_classifier_forward.1} parent=1 // pred_region
      %89 = dma.done [#allocation5], 24576
    $region37: #{clinicalbert_classifier_forward.1} parent=1 // pred_fallthru
      _
    // Predicated region
    $region38: #{clinicalbert_classifier_forward.1} parent=1 // pred_check
      _
    $region39: #{clinicalbert_classifier_forward.1} parent=1 // pred_check_branch
      %91 = sbr.rel (0) target = $region41
    $region40: #{clinicalbert_classifier_forward.1} parent=1 // pred_region
      %92 = dma.done [#allocation5], 64
    $region41: #{clinicalbert_classifier_forward.1} parent=1 // pred_fallthru
      _
    // Predicated region
    $region42: #{clinicalbert_classifier_forward.1} parent=1 // pred_check
      _
    $region43: #{clinicalbert_classifier_forward.1} parent=1 // pred_check_branch
      %94 = sbr.rel (0) target = $region45
    $region44: #{clinicalbert_classifier_forward.1} parent=1 // pred_region
      %95 = dma.done [#allocation8], 8192
    $region45: #{clinicalbert_classifier_forward.1} parent=1 // pred_fallthru
      _
    // Predicated region
    $region46: #{clinicalbert_classifier_forward.1} parent=1 // pred_check
      _
    $region47: #{clinicalbert_classifier_forward.1} parent=1 // pred_check_branch
      %97 = sbr.rel (0) target = $region49
    $region48: #{clinicalbert_classifier_forward.1} parent=1 // pred_region
      %98 = dma.done [#allocation8], 32
    $region49: #{clinicalbert_classifier_forward.1} parent=1 // pred_fallthru
      _
    // Predicated region
    $region50: #{clinicalbert_classifier_forward.1} parent=1 // pred_check
      _
    $region51: #{clinicalbert_classifier_forward.1} parent=1 // pred_check_branch
      %100 = sbr.rel (0) target = $region53
    $region52: #{clinicalbert_classifier_forward.1} parent=1 // pred_region
      %101 = dma.done [#allocation11], 2048
    $region53: #{clinicalbert_classifier_forward.1} parent=1 // pred_fallthru
      _
    %v103 = vld [vmem:[#allocation2] sm:$0xff]
    %v104 = vld [vmem:[#allocation2 + $0x8] sm:$0xff]
    %v105 = vld [vmem:[#allocation2 + $0x10] sm:$0xff]
    %v106 = vld [vmem:[#allocation2 + $0x18] sm:$0xff]
    %v107 = vld [vmem:[#allocation2 + $0x20] sm:$0xff]
    %v108 = vld [vmem:[#allocation2 + $0x28] sm:$0xff]
    %v109 = vpack.c.bf16 %v103, %v103
    %v110 = vpack.c.bf16 %v104, %v104
    %v111 = vpack.c.bf16 %v105, %v105
    %v112 = vpack.c.bf16 %v106, %v106
    %v113 = vpack.c.bf16 %v107, %v107
    %v114 = vpack.c.bf16 %v108, %v108
    %v115 = vld [vmem:[#allocation4] sm:$0xff]
    %v116 = vld [vmem:[#allocation4 + $0x8] sm:$0xff]
    %v117 = vld [vmem:[#allocation4 + $0x10] sm:$0xff]
    %v118 = vld [vmem:[#allocation4 + $0x18] sm:$0xff]
    %v119 = vld [vmem:[#allocation4 + $0x20] sm:$0xff]
    %v120 = vld [vmem:[#allocation4 + $0x28] sm:$0xff]
    %v121 = vld [vmem:[#allocation4 + $0x30] sm:$0xff]
    %v122 = vld [vmem:[#allocation4 + $0x38] sm:$0xff]
    %v123 = vld [vmem:[#allocation4 + $0x40] sm:$0xff]
    %v124 = vld [vmem:[#allocation4 + $0x48] sm:$0xff]
    %v125 = vld [vmem:[#allocation4 + $0x50] sm:$0xff]
    %v126 = vld [vmem:[#allocation4 + $0x58] sm:$0xff]
    %v127 = vld [vmem:[#allocation4 + $0x60] sm:$0xff]
    %v128 = vld [vmem:[#allocation4 + $0x68] sm:$0xff]
    %v129 = vld [vmem:[#allocation4 + $0x70] sm:$0xff]
    %v130 = vld [vmem:[#allocation4 + $0x78] sm:$0xff]
    %v131 = vld [vmem:[#allocation4 + $0x80] sm:$0xff]
    %v132 = vld [vmem:[#allocation4 + $0x88] sm:$0xff]
    %v133 = vld [vmem:[#allocation4 + $0x90] sm:$0xff]
    %v134 = vld [vmem:[#allocation4 + $0x98] sm:$0xff]
    %v135 = vld [vmem:[#allocation4 + $0xa0] sm:$0xff]
    %v136 = vld [vmem:[#allocation4 + $0xa8] sm:$0xff]
    %v137 = vld [vmem:[#allocation4 + $0xb0] sm:$0xff]
    %v138 = vld [vmem:[#allocation4 + $0xb8] sm:$0xff]
    %v139 = vld [vmem:[#allocation4 + $0xc0] sm:$0xff]
    %v140 = vld [vmem:[#allocation4 + $0xc8] sm:$0xff]
    %v141 = vld [vmem:[#allocation4 + $0xd0] sm:$0xff]
    %v142 = vld [vmem:[#allocation4 + $0xd8] sm:$0xff]
    %v143 = vld [vmem:[#allocation4 + $0xe0] sm:$0xff]
    %v144 = vld [vmem:[#allocation4 + $0xe8] sm:$0xff]
    %v145 = vld [vmem:[#allocation4 + $0xf0] sm:$0xff]
    %v146 = vld [vmem:[#allocation4 + $0xf8] sm:$0xff]
    %v147 = vld [vmem:[#allocation4 + $0x100] sm:$0xff]
    %v148 = vld [vmem:[#allocation4 + $0x108] sm:$0xff]
    %v149 = vld [vmem:[#allocation4 + $0x110] sm:$0xff]
    %v150 = vld [vmem:[#allocation4 + $0x118] sm:$0xff]
    %v151 = vld [vmem:[#allocation4 + $0x120] sm:$0xff]
    %v152 = vld [vmem:[#allocation4 + $0x128] sm:$0xff]
    %v153 = vld [vmem:[#allocation4 + $0x130] sm:$0xff]
    %v154 = vld [vmem:[#allocation4 + $0x138] sm:$0xff]
    %v155 = vld [vmem:[#allocation4 + $0x140] sm:$0xff]
    %v156 = vld [vmem:[#allocation4 + $0x148] sm:$0xff]
    %v157 = vld [vmem:[#allocation4 + $0x150] sm:$0xff]
    %v158 = vld [vmem:[#allocation4 + $0x158] sm:$0xff]
    %v159 = vld [vmem:[#allocation4 + $0x160] sm:$0xff]
    %v160 = vld [vmem:[#allocation4 + $0x168] sm:$0xff]
    %v161 = vld [vmem:[#allocation4 + $0x170] sm:$0xff]
    %v162 = vld [vmem:[#allocation4 + $0x178] sm:$0xff]
    %v163 = vld [vmem:[#allocation4 + $0x180] sm:$0xff]
    %v164 = vld [vmem:[#allocation4 + $0x188] sm:$0xff]
    %v165 = vld [vmem:[#allocation4 + $0x190] sm:$0xff]
    %v166 = vld [vmem:[#allocation4 + $0x198] sm:$0xff]
    %v167 = vld [vmem:[#allocation4 + $0x1a0] sm:$0xff]
    %v168 = vld [vmem:[#allocation4 + $0x1a8] sm:$0xff]
    %v169 = vld [vmem:[#allocation4 + $0x1b0] sm:$0xff]
    %v170 = vld [vmem:[#allocation4 + $0x1b8] sm:$0xff]
    %v171 = vld [vmem:[#allocation4 + $0x1c0] sm:$0xff]
    %v172 = vld [vmem:[#allocation4 + $0x1c8] sm:$0xff]
    %v173 = vld [vmem:[#allocation4 + $0x1d0] sm:$0xff]
    %v174 = vld [vmem:[#allocation4 + $0x1d8] sm:$0xff]
    %v175 = vld [vmem:[#allocation4 + $0x1e0] sm:$0xff]
    %v176 = vld [vmem:[#allocation4 + $0x1e8] sm:$0xff]
    %v177 = vld [vmem:[#allocation4 + $0x1f0] sm:$0xff]
    %v178 = vld [vmem:[#allocation4 + $0x1f8] sm:$0xff]
    %v179 = vld [vmem:[#allocation4 + $0x200] sm:$0xff]
    %v180 = vld [vmem:[#allocation4 + $0x208] sm:$0xff]
    %v181 = vld [vmem:[#allocation4 + $0x210] sm:$0xff]
    %v182 = vld [vmem:[#allocation4 + $0x218] sm:$0xff]
    %v183 = vld [vmem:[#allocation4 + $0x220] sm:$0xff]
    %v184 = vld [vmem:[#allocation4 + $0x228] sm:$0xff]
    %v185 = vld [vmem:[#allocation4 + $0x230] sm:$0xff]
    %v186 = vld [vmem:[#allocation4 + $0x238] sm:$0xff]
    %v187 = vld [vmem:[#allocation4 + $0x240] sm:$0xff]
    %v188 = vld [vmem:[#allocation4 + $0x248] sm:$0xff]
    %v189 = vld [vmem:[#allocation4 + $0x250] sm:$0xff]
    %v190 = vld [vmem:[#allocation4 + $0x258] sm:$0xff]
    %v191 = vld [vmem:[#allocation4 + $0x260] sm:$0xff]
    %v192 = vld [vmem:[#allocation4 + $0x268] sm:$0xff]
    %v193 = vld [vmem:[#allocation4 + $0x270] sm:$0xff]
    %v194 = vld [vmem:[#allocation4 + $0x278] sm:$0xff]
    %v195 = vld [vmem:[#allocation4 + $0x280] sm:$0xff]
    %v196 = vld [vmem:[#allocation4 + $0x288] sm:$0xff]
    %v197 = vld [vmem:[#allocation4 + $0x290] sm:$0xff]
    %v198 = vld [vmem:[#allocation4 + $0x298] sm:$0xff]
    %v199 = vld [vmem:[#allocation4 + $0x2a0] sm:$0xff]
    %v200 = vld [vmem:[#allocation4 + $0x2a8] sm:$0xff]
    %v201 = vld [vmem:[#allocation4 + $0x2b0] sm:$0xff]
    %v202 = vld [vmem:[#allocation4 + $0x2b8] sm:$0xff]
    %v203 = vld [vmem:[#allocation4 + $0x2c0] sm:$0xff]
    %v204 = vld [vmem:[#allocation4 + $0x2c8] sm:$0xff]
    %v205 = vld [vmem:[#allocation4 + $0x2d0] sm:$0xff]
    %v206 = vld [vmem:[#allocation4 + $0x2d8] sm:$0xff]
    %v207 = vld [vmem:[#allocation4 + $0x2e0] sm:$0xff]
    %v208 = vld [vmem:[#allocation4 + $0x2e8] sm:$0xff]
    %v209 = vld [vmem:[#allocation4 + $0x2f0] sm:$0xff]
    %v210 = vld [vmem:[#allocation4 + $0x2f8] sm:$0xff]
    %v211 = vld [vmem:[#allocation4 + $0x300] sm:$0xff]
    %v212 = vld [vmem:[#allocation4 + $0x308] sm:$0xff]
    %v213 = vld [vmem:[#allocation4 + $0x310] sm:$0xff]
    %v214 = vld [vmem:[#allocation4 + $0x318] sm:$0xff]
    %v215 = vld [vmem:[#allocation4 + $0x320] sm:$0xff]
    %v216 = vld [vmem:[#allocation4 + $0x328] sm:$0xff]
    %v217 = vld [vmem:[#allocation4 + $0x330] sm:$0xff]
    %v218 = vld [vmem:[#allocation4 + $0x338] sm:$0xff]
    %v219 = vld [vmem:[#allocation4 + $0x340] sm:$0xff]
    %v220 = vld [vmem:[#allocation4 + $0x348] sm:$0xff]
    %v221 = vld [vmem:[#allocation4 + $0x350] sm:$0xff]
    %v222 = vld [vmem:[#allocation4 + $0x358] sm:$0xff]
    %v223 = vld [vmem:[#allocation4 + $0x360] sm:$0xff]
    %v224 = vld [vmem:[#allocation4 + $0x368] sm:$0xff]
    %v225 = vld [vmem:[#allocation4 + $0x370] sm:$0xff]
    %v226 = vld [vmem:[#allocation4 + $0x378] sm:$0xff]
    %v227 = vld [vmem:[#allocation4 + $0x380] sm:$0xff]
    %v228 = vld [vmem:[#allocation4 + $0x388] sm:$0xff]
    %v229 = vld [vmem:[#allocation4 + $0x390] sm:$0xff]
    %v230 = vld [vmem:[#allocation4 + $0x398] sm:$0xff]
    %v231 = vld [vmem:[#allocation4 + $0x3a0] sm:$0xff]
    %v232 = vld [vmem:[#allocation4 + $0x3a8] sm:$0xff]
    %v233 = vld [vmem:[#allocation4 + $0x3b0] sm:$0xff]
    %v234 = vld [vmem:[#allocation4 + $0x3b8] sm:$0xff]
    %v235 = vld [vmem:[#allocation4 + $0x3c0] sm:$0xff]
    %v236 = vld [vmem:[#allocation4 + $0x3c8] sm:$0xff]
    %v237 = vld [vmem:[#allocation4 + $0x3d0] sm:$0xff]
    %v238 = vld [vmem:[#allocation4 + $0x3d8] sm:$0xff]
    %v239 = vld [vmem:[#allocation4 + $0x3e0] sm:$0xff]
    %v240 = vld [vmem:[#allocation4 + $0x3e8] sm:$0xff]
    %v241 = vld [vmem:[#allocation4 + $0x3f0] sm:$0xff]
    %v242 = vld [vmem:[#allocation4 + $0x3f8] sm:$0xff]
    %v243 = vld [vmem:[#allocation4 + $0x400] sm:$0xff]
    %v244 = vld [vmem:[#allocation4 + $0x408] sm:$0xff]
    %v245 = vld [vmem:[#allocation4 + $0x410] sm:$0xff]
    %v246 = vld [vmem:[#allocation4 + $0x418] sm:$0xff]
    %v247 = vld [vmem:[#allocation4 + $0x420] sm:$0xff]
    %v248 = vld [vmem:[#allocation4 + $0x428] sm:$0xff]
    %v249 = vld [vmem:[#allocation4 + $0x430] sm:$0xff]
    %v250 = vld [vmem:[#allocation4 + $0x438] sm:$0xff]
    %v251 = vld [vmem:[#allocation4 + $0x440] sm:$0xff]
    %v252 = vld [vmem:[#allocation4 + $0x448] sm:$0xff]
    %v253 = vld [vmem:[#allocation4 + $0x450] sm:$0xff]
    %v254 = vld [vmem:[#allocation4 + $0x458] sm:$0xff]
    %v255 = vld [vmem:[#allocation4 + $0x460] sm:$0xff]
    %v256 = vld [vmem:[#allocation4 + $0x468] sm:$0xff]
    %v257 = vld [vmem:[#allocation4 + $0x470] sm:$0xff]
    %v258 = vld [vmem:[#allocation4 + $0x478] sm:$0xff]
    %v259 = vld [vmem:[#allocation4 + $0x480] sm:$0xff]
    %v260 = vld [vmem:[#allocation4 + $0x488] sm:$0xff]
    %v261 = vld [vmem:[#allocation4 + $0x490] sm:$0xff]
    %v262 = vld [vmem:[#allocation4 + $0x498] sm:$0xff]
    %v263 = vld [vmem:[#allocation4 + $0x4a0] sm:$0xff]
    %v264 = vld [vmem:[#allocation4 + $0x4a8] sm:$0xff]
    %v265 = vld [vmem:[#allocation4 + $0x4b0] sm:$0xff]
    %v266 = vld [vmem:[#allocation4 + $0x4b8] sm:$0xff]
    %v267 = vld [vmem:[#allocation4 + $0x4c0] sm:$0xff]
    %v268 = vld [vmem:[#allocation4 + $0x4c8] sm:$0xff]
    %v269 = vld [vmem:[#allocation4 + $0x4d0] sm:$0xff]
    %v270 = vld [vmem:[#allocation4 + $0x4d8] sm:$0xff]
    %v271 = vld [vmem:[#allocation4 + $0x4e0] sm:$0xff]
    %v272 = vld [vmem:[#allocation4 + $0x4e8] sm:$0xff]
    %v273 = vld [vmem:[#allocation4 + $0x4f0] sm:$0xff]
    %v274 = vld [vmem:[#allocation4 + $0x4f8] sm:$0xff]
    %v275 = vld [vmem:[#allocation4 + $0x500] sm:$0xff]
    %v276 = vld [vmem:[#allocation4 + $0x508] sm:$0xff]
    %v277 = vld [vmem:[#allocation4 + $0x510] sm:$0xff]
    %v278 = vld [vmem:[#allocation4 + $0x518] sm:$0xff]
    %v279 = vld [vmem:[#allocation4 + $0x520] sm:$0xff]
    %v280 = vld [vmem:[#allocation4 + $0x528] sm:$0xff]
    %v281 = vld [vmem:[#allocation4 + $0x530] sm:$0xff]
    %v282 = vld [vmem:[#allocation4 + $0x538] sm:$0xff]
    %v283 = vld [vmem:[#allocation4 + $0x540] sm:$0xff]
    %v284 = vld [vmem:[#allocation4 + $0x548] sm:$0xff]
    %v285 = vld [vmem:[#allocation4 + $0x550] sm:$0xff]
    %v286 = vld [vmem:[#allocation4 + $0x558] sm:$0xff]
    %v287 = vld [vmem:[#allocation4 + $0x560] sm:$0xff]
    %v288 = vld [vmem:[#allocation4 + $0x568] sm:$0xff]
    %v289 = vld [vmem:[#allocation4 + $0x570] sm:$0xff]
    %v290 = vld [vmem:[#allocation4 + $0x578] sm:$0xff]
    %v291 = vld [vmem:[#allocation4 + $0x580] sm:$0xff]
    %v292 = vld [vmem:[#allocation4 + $0x588] sm:$0xff]
    %v293 = vld [vmem:[#allocation4 + $0x590] sm:$0xff]
    %v294 = vld [vmem:[#allocation4 + $0x598] sm:$0xff]
    %v295 = vld [vmem:[#allocation4 + $0x5a0] sm:$0xff]
    %v296 = vld [vmem:[#allocation4 + $0x5a8] sm:$0xff]
    %v297 = vld [vmem:[#allocation4 + $0x5b0] sm:$0xff]
    %v298 = vld [vmem:[#allocation4 + $0x5b8] sm:$0xff]
    %v299 = vld [vmem:[#allocation4 + $0x5c0] sm:$0xff]
    %v300 = vld [vmem:[#allocation4 + $0x5c8] sm:$0xff]
    %v301 = vld [vmem:[#allocation4 + $0x5d0] sm:$0xff]
    %v302 = vld [vmem:[#allocation4 + $0x5d8] sm:$0xff]
    %v303 = vld [vmem:[#allocation4 + $0x5e0] sm:$0xff]
    %v304 = vld [vmem:[#allocation4 + $0x5e8] sm:$0xff]
    %v305 = vld [vmem:[#allocation4 + $0x5f0] sm:$0xff]
    %v306 = vld [vmem:[#allocation4 + $0x5f8] sm:$0xff]
    %v307 = vld [vmem:[#allocation6] sm:$0xf]
    %v309 = vlaneseq
    %v310 = vshrl.u32 %v309, 7
    %v311 = vsub.s32 0, %v310
    %v312 = vrot.slane %v307, %v311
    %v313 = vlaneseq
    %v314 = vshrl.u32 %v313, 7
    %v315 = vsub.s32 1, %v314
    %v316 = vrot.slane %v307, %v315
    %v317 = vlaneseq
    %v318 = vshrl.u32 %v317, 7
    %v319 = vsub.s32 2, %v318
    %v320 = vrot.slane %v307, %v319
    %v321 = vlaneseq
    %v322 = vshrl.u32 %v321, 7
    %v323 = vsub.s32 3, %v322
    %v324 = vrot.slane %v307, %v323
    %v521 = vunpack.c.l.b16 %v115
    %v522 = vunpack.c.h.b16 %v115
    %v523 = vunpack.c.l.b16 %v116
    %v524 = vunpack.c.h.b16 %v116
    %v525 = vunpack.c.l.b16 %v117
    %v526 = vunpack.c.h.b16 %v117
    %v527 = vunpack.c.l.b16 %v118
    %v528 = vunpack.c.h.b16 %v118
    %v529 = vunpack.c.l.b16 %v119
    %v530 = vunpack.c.h.b16 %v119
    %v531 = vunpack.c.l.b16 %v120
    %v532 = vunpack.c.h.b16 %v120
    %v533 = vunpack.c.l.b16 %v121
    %v534 = vunpack.c.h.b16 %v121
    %v535 = vunpack.c.l.b16 %v122
    %v536 = vunpack.c.h.b16 %v122
    %v537 = vunpack.c.l.b16 %v123
    %v538 = vunpack.c.h.b16 %v123
    %v539 = vunpack.c.l.b16 %v124
    %v540 = vunpack.c.h.b16 %v124
    %v541 = vunpack.c.l.b16 %v125
    %v542 = vunpack.c.h.b16 %v125
    %v543 = vunpack.c.l.b16 %v126
    %v544 = vunpack.c.h.b16 %v126
    %v545 = vunpack.c.l.b16 %v127
    %v546 = vunpack.c.h.b16 %v127
    %v547 = vunpack.c.l.b16 %v128
    %v548 = vunpack.c.h.b16 %v128
    %v549 = vunpack.c.l.b16 %v129
    %v550 = vunpack.c.h.b16 %v129
    %v551 = vunpack.c.l.b16 %v130
    %v552 = vunpack.c.h.b16 %v130
    %v553 = vunpack.c.l.b16 %v131
    %v554 = vunpack.c.h.b16 %v131
    %v555 = vunpack.c.l.b16 %v132
    %v556 = vunpack.c.h.b16 %v132
    %v557 = vunpack.c.l.b16 %v133
    %v558 = vunpack.c.h.b16 %v133
    %v559 = vunpack.c.l.b16 %v134
    %v560 = vunpack.c.h.b16 %v134
    %v561 = vunpack.c.l.b16 %v135
    %v562 = vunpack.c.h.b16 %v135
    %v563 = vunpack.c.l.b16 %v136
    %v564 = vunpack.c.h.b16 %v136
    %v565 = vunpack.c.l.b16 %v137
    %v566 = vunpack.c.h.b16 %v137
    %v567 = vunpack.c.l.b16 %v138
    %v568 = vunpack.c.h.b16 %v138
    %v569 = vunpack.c.l.b16 %v139
    %v570 = vunpack.c.h.b16 %v139
    %v571 = vunpack.c.l.b16 %v140
    %v572 = vunpack.c.h.b16 %v140
    %v573 = vunpack.c.l.b16 %v141
    %v574 = vunpack.c.h.b16 %v141
    %v575 = vunpack.c.l.b16 %v142
    %v576 = vunpack.c.h.b16 %v142
    %v577 = vunpack.c.l.b16 %v143
    %v578 = vunpack.c.h.b16 %v143
    %v579 = vunpack.c.l.b16 %v144
    %v580 = vunpack.c.h.b16 %v144
    %v581 = vunpack.c.l.b16 %v145
    %v582 = vunpack.c.h.b16 %v145
    %v583 = vunpack.c.l.b16 %v146
    %v584 = vunpack.c.h.b16 %v146
    %v585 = vunpack.c.l.b16 %v147
    %v586 = vunpack.c.h.b16 %v147
    %v587 = vunpack.c.l.b16 %v148
    %v588 = vunpack.c.h.b16 %v148
    %v589 = vunpack.c.l.b16 %v149
    %v590 = vunpack.c.h.b16 %v149
    %v591 = vunpack.c.l.b16 %v150
    %v592 = vunpack.c.h.b16 %v150
    %v593 = vunpack.c.l.b16 %v151
    %v594 = vunpack.c.h.b16 %v151
    %v595 = vunpack.c.l.b16 %v152
    %v596 = vunpack.c.h.b16 %v152
    %v597 = vunpack.c.l.b16 %v153
    %v598 = vunpack.c.h.b16 %v153
    %v599 = vunpack.c.l.b16 %v154
    %v600 = vunpack.c.h.b16 %v154
    %v601 = vunpack.c.l.b16 %v155
    %v602 = vunpack.c.h.b16 %v155
    %v603 = vunpack.c.l.b16 %v156
    %v604 = vunpack.c.h.b16 %v156
    %v605 = vunpack.c.l.b16 %v157
    %v606 = vunpack.c.h.b16 %v157
    %v607 = vunpack.c.l.b16 %v158
    %v608 = vunpack.c.h.b16 %v158
    %v609 = vunpack.c.l.b16 %v159
    %v610 = vunpack.c.h.b16 %v159
    %v611 = vunpack.c.l.b16 %v160
    %v612 = vunpack.c.h.b16 %v160
    %v613 = vunpack.c.l.b16 %v161
    %v614 = vunpack.c.h.b16 %v161
    %v615 = vunpack.c.l.b16 %v162
    %v616 = vunpack.c.h.b16 %v162
    %v617 = vunpack.c.l.b16 %v163
    %v618 = vunpack.c.h.b16 %v163
    %v619 = vunpack.c.l.b16 %v164
    %v620 = vunpack.c.h.b16 %v164
    %v621 = vunpack.c.l.b16 %v165
    %v622 = vunpack.c.h.b16 %v165
    %v623 = vunpack.c.l.b16 %v166
    %v624 = vunpack.c.h.b16 %v166
    %v625 = vunpack.c.l.b16 %v167
    %v626 = vunpack.c.h.b16 %v167
    %v627 = vunpack.c.l.b16 %v168
    %v628 = vunpack.c.h.b16 %v168
    %v629 = vunpack.c.l.b16 %v169
    %v630 = vunpack.c.h.b16 %v169
    %v631 = vunpack.c.l.b16 %v170
    %v632 = vunpack.c.h.b16 %v170
    %v633 = vunpack.c.l.b16 %v171
    %v634 = vunpack.c.h.b16 %v171
    %v635 = vunpack.c.l.b16 %v172
    %v636 = vunpack.c.h.b16 %v172
    %v637 = vunpack.c.l.b16 %v173
    %v638 = vunpack.c.h.b16 %v173
    %v639 = vunpack.c.l.b16 %v174
    %v640 = vunpack.c.h.b16 %v174
    %v641 = vunpack.c.l.b16 %v175
    %v642 = vunpack.c.h.b16 %v175
    %v643 = vunpack.c.l.b16 %v176
    %v644 = vunpack.c.h.b16 %v176
    %v645 = vunpack.c.l.b16 %v177
    %v646 = vunpack.c.h.b16 %v177
    %v647 = vunpack.c.l.b16 %v178
    %v648 = vunpack.c.h.b16 %v178
    %v649 = vunpack.c.l.b16 %v179
    %v650 = vunpack.c.h.b16 %v179
    %v651 = vunpack.c.l.b16 %v180
    %v652 = vunpack.c.h.b16 %v180
    %v653 = vunpack.c.l.b16 %v181
    %v654 = vunpack.c.h.b16 %v181
    %v655 = vunpack.c.l.b16 %v182
    %v656 = vunpack.c.h.b16 %v182
    %v657 = vunpack.c.l.b16 %v183
    %v658 = vunpack.c.h.b16 %v183
    %v659 = vunpack.c.l.b16 %v184
    %v660 = vunpack.c.h.b16 %v184
    %v661 = vunpack.c.l.b16 %v185
    %v662 = vunpack.c.h.b16 %v185
    %v663 = vunpack.c.l.b16 %v186
    %v664 = vunpack.c.h.b16 %v186
    %v665 = vunpack.c.l.b16 %v187
    %v666 = vunpack.c.h.b16 %v187
    %v667 = vunpack.c.l.b16 %v188
    %v668 = vunpack.c.h.b16 %v188
    %v669 = vunpack.c.l.b16 %v189
    %v670 = vunpack.c.h.b16 %v189
    %v671 = vunpack.c.l.b16 %v190
    %v672 = vunpack.c.h.b16 %v190
    %v673 = vunpack.c.l.b16 %v191
    %v674 = vunpack.c.h.b16 %v191
    %v675 = vunpack.c.l.b16 %v192
    %v676 = vunpack.c.h.b16 %v192
    %v677 = vunpack.c.l.b16 %v193
    %v678 = vunpack.c.h.b16 %v193
    %v679 = vunpack.c.l.b16 %v194
    %v680 = vunpack.c.h.b16 %v194
    %v681 = vunpack.c.l.b16 %v195
    %v682 = vunpack.c.h.b16 %v195
    %v683 = vunpack.c.l.b16 %v196
    %v684 = vunpack.c.h.b16 %v196
    %v685 = vunpack.c.l.b16 %v197
    %v686 = vunpack.c.h.b16 %v197
    %v687 = vunpack.c.l.b16 %v198
    %v688 = vunpack.c.h.b16 %v198
    %v689 = vunpack.c.l.b16 %v199
    %v690 = vunpack.c.h.b16 %v199
    %v691 = vunpack.c.l.b16 %v200
    %v692 = vunpack.c.h.b16 %v200
    %v693 = vunpack.c.l.b16 %v201
    %v694 = vunpack.c.h.b16 %v201
    %v695 = vunpack.c.l.b16 %v202
    %v696 = vunpack.c.h.b16 %v202
    %v697 = vunpack.c.l.b16 %v203
    %v698 = vunpack.c.h.b16 %v203
    %v699 = vunpack.c.l.b16 %v204
    %v700 = vunpack.c.h.b16 %v204
    %v701 = vunpack.c.l.b16 %v205
    %v702 = vunpack.c.h.b16 %v205
    %v703 = vunpack.c.l.b16 %v206
    %v704 = vunpack.c.h.b16 %v206
    %v705 = vunpack.c.l.b16 %v207
    %v706 = vunpack.c.h.b16 %v207
    %v707 = vunpack.c.l.b16 %v208
    %v708 = vunpack.c.h.b16 %v208
    %v709 = vunpack.c.l.b16 %v209
    %v710 = vunpack.c.h.b16 %v209
    %v711 = vunpack.c.l.b16 %v210
    %v712 = vunpack.c.h.b16 %v210
    %v713 = vunpack.c.l.b16 %v211
    %v714 = vunpack.c.h.b16 %v211
    %v715 = vunpack.c.l.b16 %v212
    %v716 = vunpack.c.h.b16 %v212
    %v717 = vunpack.c.l.b16 %v213
    %v718 = vunpack.c.h.b16 %v213
    %v719 = vunpack.c.l.b16 %v214
    %v720 = vunpack.c.h.b16 %v214
    %v721 = vunpack.c.l.b16 %v215
    %v722 = vunpack.c.h.b16 %v215
    %v723 = vunpack.c.l.b16 %v216
    %v724 = vunpack.c.h.b16 %v216
    %v725 = vunpack.c.l.b16 %v217
    %v726 = vunpack.c.h.b16 %v217
    %v727 = vunpack.c.l.b16 %v218
    %v728 = vunpack.c.h.b16 %v218
    %v729 = vunpack.c.l.b16 %v219
    %v730 = vunpack.c.h.b16 %v219
    %v731 = vunpack.c.l.b16 %v220
    %v732 = vunpack.c.h.b16 %v220
    %v733 = vunpack.c.l.b16 %v221
    %v734 = vunpack.c.h.b16 %v221
    %v735 = vunpack.c.l.b16 %v222
    %v736 = vunpack.c.h.b16 %v222
    %v737 = vunpack.c.l.b16 %v223
    %v738 = vunpack.c.h.b16 %v223
    %v739 = vunpack.c.l.b16 %v224
    %v740 = vunpack.c.h.b16 %v224
    %v741 = vunpack.c.l.b16 %v225
    %v742 = vunpack.c.h.b16 %v225
    %v743 = vunpack.c.l.b16 %v226
    %v744 = vunpack.c.h.b16 %v226
    %v745 = vunpack.c.l.b16 %v227
    %v746 = vunpack.c.h.b16 %v227
    %v747 = vunpack.c.l.b16 %v228
    %v748 = vunpack.c.h.b16 %v228
    %v749 = vunpack.c.l.b16 %v229
    %v750 = vunpack.c.h.b16 %v229
    %v751 = vunpack.c.l.b16 %v230
    %v752 = vunpack.c.h.b16 %v230
    %v753 = vunpack.c.l.b16 %v231
    %v754 = vunpack.c.h.b16 %v231
    %v755 = vunpack.c.l.b16 %v232
    %v756 = vunpack.c.h.b16 %v232
    %v757 = vunpack.c.l.b16 %v233
    %v758 = vunpack.c.h.b16 %v233
    %v759 = vunpack.c.l.b16 %v234
    %v760 = vunpack.c.h.b16 %v234
    %v761 = vunpack.c.l.b16 %v235
    %v762 = vunpack.c.h.b16 %v235
    %v763 = vunpack.c.l.b16 %v236
    %v764 = vunpack.c.h.b16 %v236
    %v765 = vunpack.c.l.b16 %v237
    %v766 = vunpack.c.h.b16 %v237
    %v767 = vunpack.c.l.b16 %v238
    %v768 = vunpack.c.h.b16 %v238
    %v769 = vunpack.c.l.b16 %v239
    %v770 = vunpack.c.h.b16 %v239
    %v771 = vunpack.c.l.b16 %v240
    %v772 = vunpack.c.h.b16 %v240
    %v773 = vunpack.c.l.b16 %v241
    %v774 = vunpack.c.h.b16 %v241
    %v775 = vunpack.c.l.b16 %v242
    %v776 = vunpack.c.h.b16 %v242
    %v777 = vunpack.c.l.b16 %v243
    %v778 = vunpack.c.h.b16 %v243
    %v779 = vunpack.c.l.b16 %v244
    %v780 = vunpack.c.h.b16 %v244
    %v781 = vunpack.c.l.b16 %v245
    %v782 = vunpack.c.h.b16 %v245
    %v783 = vunpack.c.l.b16 %v246
    %v784 = vunpack.c.h.b16 %v246
    %v785 = vunpack.c.l.b16 %v247
    %v786 = vunpack.c.h.b16 %v247
    %v787 = vunpack.c.l.b16 %v248
    %v788 = vunpack.c.h.b16 %v248
    %v789 = vunpack.c.l.b16 %v249
    %v790 = vunpack.c.h.b16 %v249
    %v791 = vunpack.c.l.b16 %v250
    %v792 = vunpack.c.h.b16 %v250
    %v793 = vunpack.c.l.b16 %v251
    %v794 = vunpack.c.h.b16 %v251
    %v795 = vunpack.c.l.b16 %v252
    %v796 = vunpack.c.h.b16 %v252
    %v797 = vunpack.c.l.b16 %v253
    %v798 = vunpack.c.h.b16 %v253
    %v799 = vunpack.c.l.b16 %v254
    %v800 = vunpack.c.h.b16 %v254
    %v801 = vunpack.c.l.b16 %v255
    %v802 = vunpack.c.h.b16 %v255
    %v803 = vunpack.c.l.b16 %v256
    %v804 = vunpack.c.h.b16 %v256
    %v805 = vunpack.c.l.b16 %v257
    %v806 = vunpack.c.h.b16 %v257
    %v807 = vunpack.c.l.b16 %v258
    %v808 = vunpack.c.h.b16 %v258
    %v809 = vunpack.c.l.b16 %v259
    %v810 = vunpack.c.h.b16 %v259
    %v811 = vunpack.c.l.b16 %v260
    %v812 = vunpack.c.h.b16 %v260
    %v813 = vunpack.c.l.b16 %v261
    %v814 = vunpack.c.h.b16 %v261
    %v815 = vunpack.c.l.b16 %v262
    %v816 = vunpack.c.h.b16 %v262
    %v817 = vunpack.c.l.b16 %v263
    %v818 = vunpack.c.h.b16 %v263
    %v819 = vunpack.c.l.b16 %v264
    %v820 = vunpack.c.h.b16 %v264
    %v821 = vunpack.c.l.b16 %v265
    %v822 = vunpack.c.h.b16 %v265
    %v823 = vunpack.c.l.b16 %v266
    %v824 = vunpack.c.h.b16 %v266
    %v825 = vunpack.c.l.b16 %v267
    %v826 = vunpack.c.h.b16 %v267
    %v827 = vunpack.c.l.b16 %v268
    %v828 = vunpack.c.h.b16 %v268
    %v829 = vunpack.c.l.b16 %v269
    %v830 = vunpack.c.h.b16 %v269
    %v831 = vunpack.c.l.b16 %v270
    %v832 = vunpack.c.h.b16 %v270
    %v833 = vunpack.c.l.b16 %v271
    %v834 = vunpack.c.h.b16 %v271
    %v835 = vunpack.c.l.b16 %v272
    %v836 = vunpack.c.h.b16 %v272
    %v837 = vunpack.c.l.b16 %v273
    %v838 = vunpack.c.h.b16 %v273
    %v839 = vunpack.c.l.b16 %v274
    %v840 = vunpack.c.h.b16 %v274
    %v841 = vunpack.c.l.b16 %v275
    %v842 = vunpack.c.h.b16 %v275
    %v843 = vunpack.c.l.b16 %v276
    %v844 = vunpack.c.h.b16 %v276
    %v845 = vunpack.c.l.b16 %v277
    %v846 = vunpack.c.h.b16 %v277
    %v847 = vunpack.c.l.b16 %v278
    %v848 = vunpack.c.h.b16 %v278
    %v849 = vunpack.c.l.b16 %v279
    %v850 = vunpack.c.h.b16 %v279
    %v851 = vunpack.c.l.b16 %v280
    %v852 = vunpack.c.h.b16 %v280
    %v853 = vunpack.c.l.b16 %v281
    %v854 = vunpack.c.h.b16 %v281
    %v855 = vunpack.c.l.b16 %v282
    %v856 = vunpack.c.h.b16 %v282
    %v857 = vunpack.c.l.b16 %v283
    %v858 = vunpack.c.h.b16 %v283
    %v859 = vunpack.c.l.b16 %v284
    %v860 = vunpack.c.h.b16 %v284
    %v861 = vunpack.c.l.b16 %v285
    %v862 = vunpack.c.h.b16 %v285
    %v863 = vunpack.c.l.b16 %v286
    %v864 = vunpack.c.h.b16 %v286
    %v865 = vunpack.c.l.b16 %v287
    %v866 = vunpack.c.h.b16 %v287
    %v867 = vunpack.c.l.b16 %v288
    %v868 = vunpack.c.h.b16 %v288
    %v869 = vunpack.c.l.b16 %v289
    %v870 = vunpack.c.h.b16 %v289
    %v871 = vunpack.c.l.b16 %v290
    %v872 = vunpack.c.h.b16 %v290
    %v873 = vunpack.c.l.b16 %v291
    %v874 = vunpack.c.h.b16 %v291
    %v875 = vunpack.c.l.b16 %v292
    %v876 = vunpack.c.h.b16 %v292
    %v877 = vunpack.c.l.b16 %v293
    %v878 = vunpack.c.h.b16 %v293
    %v879 = vunpack.c.l.b16 %v294
    %v880 = vunpack.c.h.b16 %v294
    %v881 = vunpack.c.l.b16 %v295
    %v882 = vunpack.c.h.b16 %v295
    %v883 = vunpack.c.l.b16 %v296
    %v884 = vunpack.c.h.b16 %v296
    %v885 = vunpack.c.l.b16 %v297
    %v886 = vunpack.c.h.b16 %v297
    %v887 = vunpack.c.l.b16 %v298
    %v888 = vunpack.c.h.b16 %v298
    %v889 = vunpack.c.l.b16 %v299
    %v890 = vunpack.c.h.b16 %v299
    %v891 = vunpack.c.l.b16 %v300
    %v892 = vunpack.c.h.b16 %v300
    %v893 = vunpack.c.l.b16 %v301
    %v894 = vunpack.c.h.b16 %v301
    %v895 = vunpack.c.l.b16 %v302
    %v896 = vunpack.c.h.b16 %v302
    %v897 = vunpack.c.l.b16 %v303
    %v898 = vunpack.c.h.b16 %v303
    %v899 = vunpack.c.l.b16 %v304
    %v900 = vunpack.c.h.b16 %v304
    %v901 = vunpack.c.l.b16 %v305
    %v902 = vunpack.c.h.b16 %v305
    %v903 = vunpack.c.l.b16 %v306
    %v904 = vunpack.c.h.b16 %v306
    %v905 = vpack.c.b16 %v525, %v521
    %v906 = vpack.c.b16 %v526, %v522
    %v907 = vpack.c.b16 %v527, %v523
    %v908 = vpack.c.b16 %v528, %v524
    %v909 = vpack.c.b16 %v533, %v529
    %v910 = vpack.c.b16 %v534, %v530
    %v911 = vpack.c.b16 %v535, %v531
    %v912 = vpack.c.b16 %v536, %v532
    %v913 = vpack.c.b16 %v541, %v537
    %v914 = vpack.c.b16 %v542, %v538
    %v915 = vpack.c.b16 %v543, %v539
    %v916 = vpack.c.b16 %v544, %v540
    %v917 = vpack.c.b16 %v549, %v545
    %v918 = vpack.c.b16 %v550, %v546
    %v919 = vpack.c.b16 %v551, %v547
    %v920 = vpack.c.b16 %v552, %v548
    %v921 = vpack.c.b16 %v557, %v553
    %v922 = vpack.c.b16 %v558, %v554
    %v923 = vpack.c.b16 %v559, %v555
    %v924 = vpack.c.b16 %v560, %v556
    %v925 = vpack.c.b16 %v565, %v561
    %v926 = vpack.c.b16 %v566, %v562
    %v927 = vpack.c.b16 %v567, %v563
    %v928 = vpack.c.b16 %v568, %v564
    %v929 = vpack.c.b16 %v573, %v569
    %v930 = vpack.c.b16 %v574, %v570
    %v931 = vpack.c.b16 %v575, %v571
    %v932 = vpack.c.b16 %v576, %v572
    %v933 = vpack.c.b16 %v581, %v577
    %v934 = vpack.c.b16 %v582, %v578
    %v935 = vpack.c.b16 %v583, %v579
    %v936 = vpack.c.b16 %v584, %v580
    %v937 = vpack.c.b16 %v589, %v585
    %v938 = vpack.c.b16 %v590, %v586
    %v939 = vpack.c.b16 %v591, %v587
    %v940 = vpack.c.b16 %v592, %v588
    %v941 = vpack.c.b16 %v597, %v593
    %v942 = vpack.c.b16 %v598, %v594
    %v943 = vpack.c.b16 %v599, %v595
    %v944 = vpack.c.b16 %v600, %v596
    %v945 = vpack.c.b16 %v605, %v601
    %v946 = vpack.c.b16 %v606, %v602
    %v947 = vpack.c.b16 %v607, %v603
    %v948 = vpack.c.b16 %v608, %v604
    %v949 = vpack.c.b16 %v613, %v609
    %v950 = vpack.c.b16 %v614, %v610
    %v951 = vpack.c.b16 %v615, %v611
    %v952 = vpack.c.b16 %v616, %v612
    %v953 = vpack.c.b16 %v621, %v617
    %v954 = vpack.c.b16 %v622, %v618
    %v955 = vpack.c.b16 %v623, %v619
    %v956 = vpack.c.b16 %v624, %v620
    %v957 = vpack.c.b16 %v629, %v625
    %v958 = vpack.c.b16 %v630, %v626
    %v959 = vpack.c.b16 %v631, %v627
    %v960 = vpack.c.b16 %v632, %v628
    %v961 = vpack.c.b16 %v637, %v633
    %v962 = vpack.c.b16 %v638, %v634
    %v963 = vpack.c.b16 %v639, %v635
    %v964 = vpack.c.b16 %v640, %v636
    %v965 = vpack.c.b16 %v645, %v641
    %v966 = vpack.c.b16 %v646, %v642
    %v967 = vpack.c.b16 %v647, %v643
    %v968 = vpack.c.b16 %v648, %v644
    %v969 = vpack.c.b16 %v653, %v649
    %v970 = vpack.c.b16 %v654, %v650
    %v971 = vpack.c.b16 %v655, %v651
    %v972 = vpack.c.b16 %v656, %v652
    %v973 = vpack.c.b16 %v661, %v657
    %v974 = vpack.c.b16 %v662, %v658
    %v975 = vpack.c.b16 %v663, %v659
    %v976 = vpack.c.b16 %v664, %v660
    %v977 = vpack.c.b16 %v669, %v665
    %v978 = vpack.c.b16 %v670, %v666
    %v979 = vpack.c.b16 %v671, %v667
    %v980 = vpack.c.b16 %v672, %v668
    %v981 = vpack.c.b16 %v677, %v673
    %v982 = vpack.c.b16 %v678, %v674
    %v983 = vpack.c.b16 %v679, %v675
    %v984 = vpack.c.b16 %v680, %v676
    %v985 = vpack.c.b16 %v685, %v681
    %v986 = vpack.c.b16 %v686, %v682
    %v987 = vpack.c.b16 %v687, %v683
    %v988 = vpack.c.b16 %v688, %v684
    %v989 = vpack.c.b16 %v693, %v689
    %v990 = vpack.c.b16 %v694, %v690
    %v991 = vpack.c.b16 %v695, %v691
    %v992 = vpack.c.b16 %v696, %v692
    %v993 = vpack.c.b16 %v701, %v697
    %v994 = vpack.c.b16 %v702, %v698
    %v995 = vpack.c.b16 %v703, %v699
    %v996 = vpack.c.b16 %v704, %v700
    %v997 = vpack.c.b16 %v709, %v705
    %v998 = vpack.c.b16 %v710, %v706
    %v999 = vpack.c.b16 %v711, %v707
    %v1000 = vpack.c.b16 %v712, %v708
    %v1001 = vpack.c.b16 %v717, %v713
    %v1002 = vpack.c.b16 %v718, %v714
    %v1003 = vpack.c.b16 %v719, %v715
    %v1004 = vpack.c.b16 %v720, %v716
    %v1005 = vpack.c.b16 %v725, %v721
    %v1006 = vpack.c.b16 %v726, %v722
    %v1007 = vpack.c.b16 %v727, %v723
    %v1008 = vpack.c.b16 %v728, %v724
    %v1009 = vpack.c.b16 %v733, %v729
    %v1010 = vpack.c.b16 %v734, %v730
    %v1011 = vpack.c.b16 %v735, %v731
    %v1012 = vpack.c.b16 %v736, %v732
    %v1013 = vpack.c.b16 %v741, %v737
    %v1014 = vpack.c.b16 %v742, %v738
    %v1015 = vpack.c.b16 %v743, %v739
    %v1016 = vpack.c.b16 %v744, %v740
    %v1017 = vpack.c.b16 %v749, %v745
    %v1018 = vpack.c.b16 %v750, %v746
    %v1019 = vpack.c.b16 %v751, %v747
    %v1020 = vpack.c.b16 %v752, %v748
    %v1021 = vpack.c.b16 %v757, %v753
    %v1022 = vpack.c.b16 %v758, %v754
    %v1023 = vpack.c.b16 %v759, %v755
    %v1024 = vpack.c.b16 %v760, %v756
    %v1025 = vpack.c.b16 %v765, %v761
    %v1026 = vpack.c.b16 %v766, %v762
    %v1027 = vpack.c.b16 %v767, %v763
    %v1028 = vpack.c.b16 %v768, %v764
    %v1029 = vpack.c.b16 %v773, %v769
    %v1030 = vpack.c.b16 %v774, %v770
    %v1031 = vpack.c.b16 %v775, %v771
    %v1032 = vpack.c.b16 %v776, %v772
    %v1033 = vpack.c.b16 %v781, %v777
    %v1034 = vpack.c.b16 %v782, %v778
    %v1035 = vpack.c.b16 %v783, %v779
    %v1036 = vpack.c.b16 %v784, %v780
    %v1037 = vpack.c.b16 %v789, %v785
    %v1038 = vpack.c.b16 %v790, %v786
    %v1039 = vpack.c.b16 %v791, %v787
    %v1040 = vpack.c.b16 %v792, %v788
    %v1041 = vpack.c.b16 %v797, %v793
    %v1042 = vpack.c.b16 %v798, %v794
    %v1043 = vpack.c.b16 %v799, %v795
    %v1044 = vpack.c.b16 %v800, %v796
    %v1045 = vpack.c.b16 %v805, %v801
    %v1046 = vpack.c.b16 %v806, %v802
    %v1047 = vpack.c.b16 %v807, %v803
    %v1048 = vpack.c.b16 %v808, %v804
    %v1049 = vpack.c.b16 %v813, %v809
    %v1050 = vpack.c.b16 %v814, %v810
    %v1051 = vpack.c.b16 %v815, %v811
    %v1052 = vpack.c.b16 %v816, %v812
    %v1053 = vpack.c.b16 %v821, %v817
    %v1054 = vpack.c.b16 %v822, %v818
    %v1055 = vpack.c.b16 %v823, %v819
    %v1056 = vpack.c.b16 %v824, %v820
    %v1057 = vpack.c.b16 %v829, %v825
    %v1058 = vpack.c.b16 %v830, %v826
    %v1059 = vpack.c.b16 %v831, %v827
    %v1060 = vpack.c.b16 %v832, %v828
    %v1061 = vpack.c.b16 %v837, %v833
    %v1062 = vpack.c.b16 %v838, %v834
    %v1063 = vpack.c.b16 %v839, %v835
    %v1064 = vpack.c.b16 %v840, %v836
    %v1065 = vpack.c.b16 %v845, %v841
    %v1066 = vpack.c.b16 %v846, %v842
    %v1067 = vpack.c.b16 %v847, %v843
    %v1068 = vpack.c.b16 %v848, %v844
    %v1069 = vpack.c.b16 %v853, %v849
    %v1070 = vpack.c.b16 %v854, %v850
    %v1071 = vpack.c.b16 %v855, %v851
    %v1072 = vpack.c.b16 %v856, %v852
    %v1073 = vpack.c.b16 %v861, %v857
    %v1074 = vpack.c.b16 %v862, %v858
    %v1075 = vpack.c.b16 %v863, %v859
    %v1076 = vpack.c.b16 %v864, %v860
    %v1077 = vpack.c.b16 %v869, %v865
    %v1078 = vpack.c.b16 %v870, %v866
    %v1079 = vpack.c.b16 %v871, %v867
    %v1080 = vpack.c.b16 %v872, %v868
    %v1081 = vpack.c.b16 %v877, %v873
    %v1082 = vpack.c.b16 %v878, %v874
    %v1083 = vpack.c.b16 %v879, %v875
    %v1084 = vpack.c.b16 %v880, %v876
    %v1085 = vpack.c.b16 %v885, %v881
    %v1086 = vpack.c.b16 %v886, %v882
    %v1087 = vpack.c.b16 %v887, %v883
    %v1088 = vpack.c.b16 %v888, %v884
    %v1089 = vpack.c.b16 %v893, %v889
    %v1090 = vpack.c.b16 %v894, %v890
    %v1091 = vpack.c.b16 %v895, %v891
    %v1092 = vpack.c.b16 %v896, %v892
    %v1093 = vpack.c.b16 %v901, %v897
    %v1094 = vpack.c.b16 %v902, %v898
    %v1095 = vpack.c.b16 %v903, %v899
    %v1096 = vpack.c.b16 %v904, %v900
    %1289 = vmatprep.subr.bf16.mxu0 %v934
    %1290 = vmatpush1.bf16.msra.mxu0 %v933
    %1291 = vmatprep.subr.bf16.mxu0 %v930
    %1292 = vmatpush1.bf16.msra.mxu0 %v929
    %1293 = vmatprep.subr.bf16.mxu0 %v926
    %1294 = vmatpush1.bf16.msra.mxu0 %v925
    %1295 = vmatprep.subr.bf16.mxu0 %v922
    %1296 = vmatpush1.bf16.msra.mxu0 %v921
    %1297 = vmatprep.subr.bf16.mxu0 %v918
    %1298 = vmatpush1.bf16.msra.mxu0 %v917
    %1299 = vmatprep.subr.bf16.mxu0 %v914
    %1300 = vmatpush1.bf16.msra.mxu0 %v913
    %1301 = vmatprep.subr.bf16.mxu0 %v910
    %1302 = vmatpush1.bf16.msra.mxu0 %v909
    %1303 = vmatprep.subr.bf16.mxu0 %v906
    %1304 = vmatpush1.bf16.msra.mxu0 %v905
    %1305 = vmatprep.subr.bf16.mxu0 %v966
    %1306 = vmatpush2.bf16.msra.mxu0 %v965
    %1307 = vmatprep.subr.bf16.mxu0 %v962
    %1308 = vmatpush2.bf16.msra.mxu0 %v961
    %1309 = vmatprep.subr.bf16.mxu0 %v958
    %1310 = vmatpush2.bf16.msra.mxu0 %v957
    %1311 = vmatprep.subr.bf16.mxu0 %v954
    %1312 = vmatpush2.bf16.msra.mxu0 %v953
    %1313 = vmatprep.subr.bf16.mxu0 %v950
    %1314 = vmatpush2.bf16.msra.mxu0 %v949
    %1315 = vmatprep.subr.bf16.mxu0 %v946
    %1316 = vmatpush2.bf16.msra.mxu0 %v945
    %1317 = vmatprep.subr.bf16.mxu0 %v942
    %1318 = vmatpush2.bf16.msra.mxu0 %v941
    %1319 = vmatprep.subr.bf16.mxu0 %v938
    %1320 = vmatpush2.bf16.msra.mxu0 %v937
    %1321 = vmatprep.mubr.bf16.mxu0 %v110
    %1322 = vmatmul.mubr.bf16.gmra.mxu0 %v109
    %v1323 = vpop.f32.mrf.mxu0
    %v1324 = vadd.f32 %v312, %v1323
    %v1325 = vpop.f32.mrf.mxu0
    %v1326 = vadd.f32 %v316, %v1325
    %v1327 = vpop.f32.mrf.mxu0
    %v1328 = vpop.f32.mrf.mxu0
    %1329 = vdwg.mxu0
    %1330 = vmatprep.subr.bf16.mxu0 %v998
    %1331 = vmatpush1.bf16.msra.mxu0 %v997
    %1332 = vmatprep.subr.bf16.mxu0 %v994
    %1333 = vmatpush1.bf16.msra.mxu0 %v993
    %1334 = vmatprep.subr.bf16.mxu0 %v990
    %1335 = vmatpush1.bf16.msra.mxu0 %v989
    %1336 = vmatprep.subr.bf16.mxu0 %v986
    %1337 = vmatpush1.bf16.msra.mxu0 %v985
    %1338 = vmatprep.subr.bf16.mxu0 %v982
    %1339 = vmatpush1.bf16.msra.mxu0 %v981
    %1340 = vmatprep.subr.bf16.mxu0 %v978
    %1341 = vmatpush1.bf16.msra.mxu0 %v977
    %1342 = vmatprep.subr.bf16.mxu0 %v974
    %1343 = vmatpush1.bf16.msra.mxu0 %v973
    %1344 = vmatprep.subr.bf16.mxu0 %v970
    %1345 = vmatpush1.bf16.msra.mxu0 %v969
    %1346 = vmatprep.subr.bf16.mxu0 %v1030
    %1347 = vmatpush2.bf16.msra.mxu0 %v1029
    %1348 = vmatprep.subr.bf16.mxu0 %v1026
    %1349 = vmatpush2.bf16.msra.mxu0 %v1025
    %1350 = vmatprep.subr.bf16.mxu0 %v1022
    %1351 = vmatpush2.bf16.msra.mxu0 %v1021
    %1352 = vmatprep.subr.bf16.mxu0 %v1018
    %1353 = vmatpush2.bf16.msra.mxu0 %v1017
    %1354 = vmatprep.subr.bf16.mxu0 %v1014
    %1355 = vmatpush2.bf16.msra.mxu0 %v1013
    %1356 = vmatprep.subr.bf16.mxu0 %v1010
    %1357 = vmatpush2.bf16.msra.mxu0 %v1009
    %1358 = vmatprep.subr.bf16.mxu0 %v1006
    %1359 = vmatpush2.bf16.msra.mxu0 %v1005
    %1360 = vmatprep.subr.bf16.mxu0 %v1002
    %1361 = vmatpush2.bf16.msra.mxu0 %v1001
    %1362 = vmatprep.mubr.bf16.mxu0 %v112
    %1363 = vmatmul.mubr.bf16.gmra.mxu0 %v111
    %v1364 = vpop.f32.mrf.mxu0
    %v1365 = vadd.f32 %v1324, %v1364
    %v1366 = vpop.f32.mrf.mxu0
    %v1367 = vadd.f32 %v1326, %v1366
    %v1368 = vpop.f32.mrf.mxu0
    %v1369 = vpop.f32.mrf.mxu0
    %1370 = vdwg.mxu0
    %1371 = vmatprep.subr.bf16.mxu0 %v1062
    %1372 = vmatpush1.bf16.msra.mxu0 %v1061
    %1373 = vmatprep.subr.bf16.mxu0 %v1058
    %1374 = vmatpush1.bf16.msra.mxu0 %v1057
    %1375 = vmatprep.subr.bf16.mxu0 %v1054
    %1376 = vmatpush1.bf16.msra.mxu0 %v1053
    %1377 = vmatprep.subr.bf16.mxu0 %v1050
    %1378 = vmatpush1.bf16.msra.mxu0 %v1049
    %1379 = vmatprep.subr.bf16.mxu0 %v1046
    %1380 = vmatpush1.bf16.msra.mxu0 %v1045
    %1381 = vmatprep.subr.bf16.mxu0 %v1042
    %1382 = vmatpush1.bf16.msra.mxu0 %v1041
    %1383 = vmatprep.subr.bf16.mxu0 %v1038
    %1384 = vmatpush1.bf16.msra.mxu0 %v1037
    %1385 = vmatprep.subr.bf16.mxu0 %v1034
    %1386 = vmatpush1.bf16.msra.mxu0 %v1033
    %1387 = vmatprep.subr.bf16.mxu0 %v1094
    %1388 = vmatpush2.bf16.msra.mxu0 %v1093
    %1389 = vmatprep.subr.bf16.mxu0 %v1090
    %1390 = vmatpush2.bf16.msra.mxu0 %v1089
    %1391 = vmatprep.subr.bf16.mxu0 %v1086
    %1392 = vmatpush2.bf16.msra.mxu0 %v1085
    %1393 = vmatprep.subr.bf16.mxu0 %v1082
    %1394 = vmatpush2.bf16.msra.mxu0 %v1081
    %1395 = vmatprep.subr.bf16.mxu0 %v1078
    %1396 = vmatpush2.bf16.msra.mxu0 %v1077
    %1397 = vmatprep.subr.bf16.mxu0 %v1074
    %1398 = vmatpush2.bf16.msra.mxu0 %v1073
    %1399 = vmatprep.subr.bf16.mxu0 %v1070
    %1400 = vmatpush2.bf16.msra.mxu0 %v1069
    %1401 = vmatprep.subr.bf16.mxu0 %v1066
    %1402 = vmatpush2.bf16.msra.mxu0 %v1065
    %1403 = vmatprep.mubr.bf16.mxu0 %v114
    %1404 = vmatmul.mubr.bf16.gmra.mxu0 %v113
    %v1405 = vpop.f32.mrf.mxu0
    %v1406 = vadd.f32 %v1365, %v1405
    %v1407 = vpop.f32.mrf.mxu0
    %v1408 = vadd.f32 %v1367, %v1407
    %v1409 = vpop.f32.mrf.mxu0
    %v1410 = vpop.f32.mrf.mxu0
    %1411 = vdwg.mxu0
    %1412 = vmatprep.subr.bf16.mxu0 %v936
    %1413 = vmatpush1.bf16.msra.mxu0 %v935
    %1414 = vmatprep.subr.bf16.mxu0 %v932
    %1415 = vmatpush1.bf16.msra.mxu0 %v931
    %1416 = vmatprep.subr.bf16.mxu0 %v928
    %1417 = vmatpush1.bf16.msra.mxu0 %v927
    %1418 = vmatprep.subr.bf16.mxu0 %v924
    %1419 = vmatpush1.bf16.msra.mxu0 %v923
    %1420 = vmatprep.subr.bf16.mxu0 %v920
    %1421 = vmatpush1.bf16.msra.mxu0 %v919
    %1422 = vmatprep.subr.bf16.mxu0 %v916
    %1423 = vmatpush1.bf16.msra.mxu0 %v915
    %1424 = vmatprep.subr.bf16.mxu0 %v912
    %1425 = vmatpush1.bf16.msra.mxu0 %v911
    %1426 = vmatprep.subr.bf16.mxu0 %v908
    %1427 = vmatpush1.bf16.msra.mxu0 %v907
    %1428 = vmatprep.subr.bf16.mxu0 %v968
    %1429 = vmatpush2.bf16.msra.mxu0 %v967
    %1430 = vmatprep.subr.bf16.mxu0 %v964
    %1431 = vmatpush2.bf16.msra.mxu0 %v963
    %1432 = vmatprep.subr.bf16.mxu0 %v960
    %1433 = vmatpush2.bf16.msra.mxu0 %v959
    %1434 = vmatprep.subr.bf16.mxu0 %v956
    %1435 = vmatpush2.bf16.msra.mxu0 %v955
    %1436 = vmatprep.subr.bf16.mxu0 %v952
    %1437 = vmatpush2.bf16.msra.mxu0 %v951
    %1438 = vmatprep.subr.bf16.mxu0 %v948
    %1439 = vmatpush2.bf16.msra.mxu0 %v947
    %1440 = vmatprep.subr.bf16.mxu0 %v944
    %1441 = vmatpush2.bf16.msra.mxu0 %v943
    %1442 = vmatprep.subr.bf16.mxu0 %v940
    %1443 = vmatpush2.bf16.msra.mxu0 %v939
    %1444 = vmatprep.mubr.bf16.mxu0 %v110
    %1445 = vmatmul.mubr.bf16.gmra.mxu0 %v109
    %v1446 = vpop.f32.mrf.mxu0
    %v1447 = vadd.f32 %v320, %v1446
    %v1448 = vpop.f32.mrf.mxu0
    %v1449 = vadd.f32 %v324, %v1448
    %v1450 = vpop.f32.mrf.mxu0
    %v1451 = vpop.f32.mrf.mxu0
    %1452 = vdwg.mxu0
    %1453 = vmatprep.subr.bf16.mxu0 %v1000
    %1454 = vmatpush1.bf16.msra.mxu0 %v999
    %1455 = vmatprep.subr.bf16.mxu0 %v996
    %1456 = vmatpush1.bf16.msra.mxu0 %v995
    %1457 = vmatprep.subr.bf16.mxu0 %v992
    %1458 = vmatpush1.bf16.msra.mxu0 %v991
    %1459 = vmatprep.subr.bf16.mxu0 %v988
    %1460 = vmatpush1.bf16.msra.mxu0 %v987
    %1461 = vmatprep.subr.bf16.mxu0 %v984
    %1462 = vmatpush1.bf16.msra.mxu0 %v983
    %1463 = vmatprep.subr.bf16.mxu0 %v980
    %1464 = vmatpush1.bf16.msra.mxu0 %v979
    %1465 = vmatprep.subr.bf16.mxu0 %v976
    %1466 = vmatpush1.bf16.msra.mxu0 %v975
    %1467 = vmatprep.subr.bf16.mxu0 %v972
    %1468 = vmatpush1.bf16.msra.mxu0 %v971
    %1469 = vmatprep.subr.bf16.mxu0 %v1032
    %1470 = vmatpush2.bf16.msra.mxu0 %v1031
    %1471 = vmatprep.subr.bf16.mxu0 %v1028
    %1472 = vmatpush2.bf16.msra.mxu0 %v1027
    %1473 = vmatprep.subr.bf16.mxu0 %v1024
    %1474 = vmatpush2.bf16.msra.mxu0 %v1023
    %1475 = vmatprep.subr.bf16.mxu0 %v1020
    %1476 = vmatpush2.bf16.msra.mxu0 %v1019
    %1477 = vmatprep.subr.bf16.mxu0 %v1016
    %1478 = vmatpush2.bf16.msra.mxu0 %v1015
    %1479 = vmatprep.subr.bf16.mxu0 %v1012
    %1480 = vmatpush2.bf16.msra.mxu0 %v1011
    %1481 = vmatprep.subr.bf16.mxu0 %v1008
    %1482 = vmatpush2.bf16.msra.mxu0 %v1007
    %1483 = vmatprep.subr.bf16.mxu0 %v1004
    %1484 = vmatpush2.bf16.msra.mxu0 %v1003
    %1485 = vmatprep.mubr.bf16.mxu0 %v112
    %1486 = vmatmul.mubr.bf16.gmra.mxu0 %v111
    %v1487 = vpop.f32.mrf.mxu0
    %v1488 = vadd.f32 %v1447, %v1487
    %v1489 = vpop.f32.mrf.mxu0
    %v1490 = vadd.f32 %v1449, %v1489
    %v1491 = vpop.f32.mrf.mxu0
    %v1492 = vpop.f32.mrf.mxu0
    %1493 = vdwg.mxu0
    %1494 = vmatprep.subr.bf16.mxu0 %v1064
    %1495 = vmatpush1.bf16.msra.mxu0 %v1063
    %1496 = vmatprep.subr.bf16.mxu0 %v1060
    %1497 = vmatpush1.bf16.msra.mxu0 %v1059
    %1498 = vmatprep.subr.bf16.mxu0 %v1056
    %1499 = vmatpush1.bf16.msra.mxu0 %v1055
    %1500 = vmatprep.subr.bf16.mxu0 %v1052
    %1501 = vmatpush1.bf16.msra.mxu0 %v1051
    %1502 = vmatprep.subr.bf16.mxu0 %v1048
    %1503 = vmatpush1.bf16.msra.mxu0 %v1047
    %1504 = vmatprep.subr.bf16.mxu0 %v1044
    %1505 = vmatpush1.bf16.msra.mxu0 %v1043
    %1506 = vmatprep.subr.bf16.mxu0 %v1040
    %1507 = vmatpush1.bf16.msra.mxu0 %v1039
    %1508 = vmatprep.subr.bf16.mxu0 %v1036
    %1509 = vmatpush1.bf16.msra.mxu0 %v1035
    %1510 = vmatprep.subr.bf16.mxu0 %v1096
    %1511 = vmatpush2.bf16.msra.mxu0 %v1095
    %1512 = vmatprep.subr.bf16.mxu0 %v1092
    %1513 = vmatpush2.bf16.msra.mxu0 %v1091
    %1514 = vmatprep.subr.bf16.mxu0 %v1088
    %1515 = vmatpush2.bf16.msra.mxu0 %v1087
    %1516 = vmatprep.subr.bf16.mxu0 %v1084
    %1517 = vmatpush2.bf16.msra.mxu0 %v1083
    %1518 = vmatprep.subr.bf16.mxu0 %v1080
    %1519 = vmatpush2.bf16.msra.mxu0 %v1079
    %1520 = vmatprep.subr.bf16.mxu0 %v1076
    %1521 = vmatpush2.bf16.msra.mxu0 %v1075
    %1522 = vmatprep.subr.bf16.mxu0 %v1072
    %1523 = vmatpush2.bf16.msra.mxu0 %v1071
    %1524 = vmatprep.subr.bf16.mxu0 %v1068
    %1525 = vmatpush2.bf16.msra.mxu0 %v1067
    %1526 = vmatprep.mubr.bf16.mxu0 %v114
    %1527 = vmatmul.mubr.bf16.gmra.mxu0 %v113
    %v1528 = vpop.f32.mrf.mxu0
    %v1529 = vadd.f32 %v1488, %v1528
    %v1530 = vpop.f32.mrf.mxu0
    %v1531 = vadd.f32 %v1490, %v1530
    %v1532 = vpop.f32.mrf.mxu0
    %v1533 = vpop.f32.mrf.mxu0
    %1534 = vdwg.mxu0
    %v1535 = vmax.f32 %v1406, 0.0
    %v1536 = vmax.f32 %v1408, 0.0
    %v1537 = vmax.f32 %v1529, 0.0
    %v1538 = vmax.f32 %v1531, 0.0
    %v1539 = vpack.c.bf16 %v1535, %v1535
    %v1540 = vpack.c.bf16 %v1536, %v1536
    %v1541 = vpack.c.bf16 %v1537, %v1537
    %v1542 = vpack.c.bf16 %v1538, %v1538
    %v1543 = vld [vmem:[#allocation7] sm:$0xff]
    %v1544 = vld [vmem:[#allocation7 + $0x8] sm:$0xff]
    %v1545 = vld [vmem:[#allocation7 + $0x10] sm:$0xff]
    %v1546 = vld [vmem:[#allocation7 + $0x18] sm:$0xff]
    %v1547 = vld [vmem:[#allocation7 + $0x20] sm:$0xff]
    %v1548 = vld [vmem:[#allocation7 + $0x28] sm:$0xff]
    %v1549 = vld [vmem:[#allocation7 + $0x30] sm:$0xff]
    %v1550 = vld [vmem:[#allocation7 + $0x38] sm:$0xff]
    %v1551 = vld [vmem:[#allocation7 + $0x40] sm:$0xff]
    %v1552 = vld [vmem:[#allocation7 + $0x48] sm:$0xff]
    %v1553 = vld [vmem:[#allocation7 + $0x50] sm:$0xff]
    %v1554 = vld [vmem:[#allocation7 + $0x58] sm:$0xff]
    %v1555 = vld [vmem:[#allocation7 + $0x60] sm:$0xff]
    %v1556 = vld [vmem:[#allocation7 + $0x68] sm:$0xff]
    %v1557 = vld [vmem:[#allocation7 + $0x70] sm:$0xff]
    %v1558 = vld [vmem:[#allocation7 + $0x78] sm:$0xff]
    %v1559 = vld [vmem:[#allocation7 + $0x80] sm:$0xff]
    %v1560 = vld [vmem:[#allocation7 + $0x88] sm:$0xff]
    %v1561 = vld [vmem:[#allocation7 + $0x90] sm:$0xff]
    %v1562 = vld [vmem:[#allocation7 + $0x98] sm:$0xff]
    %v1563 = vld [vmem:[#allocation7 + $0xa0] sm:$0xff]
    %v1564 = vld [vmem:[#allocation7 + $0xa8] sm:$0xff]
    %v1565 = vld [vmem:[#allocation7 + $0xb0] sm:$0xff]
    %v1566 = vld [vmem:[#allocation7 + $0xb8] sm:$0xff]
    %v1567 = vld [vmem:[#allocation7 + $0xc0] sm:$0xff]
    %v1568 = vld [vmem:[#allocation7 + $0xc8] sm:$0xff]
    %v1569 = vld [vmem:[#allocation7 + $0xd0] sm:$0xff]
    %v1570 = vld [vmem:[#allocation7 + $0xd8] sm:$0xff]
    %v1571 = vld [vmem:[#allocation7 + $0xe0] sm:$0xff]
    %v1572 = vld [vmem:[#allocation7 + $0xe8] sm:$0xff]
    %v1573 = vld [vmem:[#allocation7 + $0xf0] sm:$0xff]
    %v1574 = vld [vmem:[#allocation7 + $0xf8] sm:$0xff]
    %v1575 = vld [vmem:[#allocation7 + $0x100] sm:$0xff]
    %v1576 = vld [vmem:[#allocation7 + $0x108] sm:$0xff]
    %v1577 = vld [vmem:[#allocation7 + $0x110] sm:$0xff]
    %v1578 = vld [vmem:[#allocation7 + $0x118] sm:$0xff]
    %v1579 = vld [vmem:[#allocation7 + $0x120] sm:$0xff]
    %v1580 = vld [vmem:[#allocation7 + $0x128] sm:$0xff]
    %v1581 = vld [vmem:[#allocation7 + $0x130] sm:$0xff]
    %v1582 = vld [vmem:[#allocation7 + $0x138] sm:$0xff]
    %v1583 = vld [vmem:[#allocation7 + $0x140] sm:$0xff]
    %v1584 = vld [vmem:[#allocation7 + $0x148] sm:$0xff]
    %v1585 = vld [vmem:[#allocation7 + $0x150] sm:$0xff]
    %v1586 = vld [vmem:[#allocation7 + $0x158] sm:$0xff]
    %v1587 = vld [vmem:[#allocation7 + $0x160] sm:$0xff]
    %v1588 = vld [vmem:[#allocation7 + $0x168] sm:$0xff]
    %v1589 = vld [vmem:[#allocation7 + $0x170] sm:$0xff]
    %v1590 = vld [vmem:[#allocation7 + $0x178] sm:$0xff]
    %v1591 = vld [vmem:[#allocation7 + $0x180] sm:$0xff]
    %v1592 = vld [vmem:[#allocation7 + $0x188] sm:$0xff]
    %v1593 = vld [vmem:[#allocation7 + $0x190] sm:$0xff]
    %v1594 = vld [vmem:[#allocation7 + $0x198] sm:$0xff]
    %v1595 = vld [vmem:[#allocation7 + $0x1a0] sm:$0xff]
    %v1596 = vld [vmem:[#allocation7 + $0x1a8] sm:$0xff]
    %v1597 = vld [vmem:[#allocation7 + $0x1b0] sm:$0xff]
    %v1598 = vld [vmem:[#allocation7 + $0x1b8] sm:$0xff]
    %v1599 = vld [vmem:[#allocation7 + $0x1c0] sm:$0xff]
    %v1600 = vld [vmem:[#allocation7 + $0x1c8] sm:$0xff]
    %v1601 = vld [vmem:[#allocation7 + $0x1d0] sm:$0xff]
    %v1602 = vld [vmem:[#allocation7 + $0x1d8] sm:$0xff]
    %v1603 = vld [vmem:[#allocation7 + $0x1e0] sm:$0xff]
    %v1604 = vld [vmem:[#allocation7 + $0x1e8] sm:$0xff]
    %v1605 = vld [vmem:[#allocation7 + $0x1f0] sm:$0xff]
    %v1606 = vld [vmem:[#allocation7 + $0x1f8] sm:$0xff]
    %v1607 = vld [vmem:[#allocation9] sm:$0x3]
    %v1609 = vlaneseq
    %v1610 = vshrl.u32 %v1609, 7
    %v1611 = vsub.s32 0, %v1610
    %v1612 = vrot.slane %v1607, %v1611
    %v1613 = vlaneseq
    %v1614 = vshrl.u32 %v1613, 7
    %v1615 = vsub.s32 1, %v1614
    %v1616 = vrot.slane %v1607, %v1615
    %v1683 = vunpack.c.l.b16 %v1543
    %v1684 = vunpack.c.h.b16 %v1543
    %v1685 = vunpack.c.l.b16 %v1544
    %v1686 = vunpack.c.h.b16 %v1544
    %v1687 = vunpack.c.l.b16 %v1545
    %v1688 = vunpack.c.h.b16 %v1545
    %v1689 = vunpack.c.l.b16 %v1546
    %v1690 = vunpack.c.h.b16 %v1546
    %v1691 = vunpack.c.l.b16 %v1547
    %v1692 = vunpack.c.h.b16 %v1547
    %v1693 = vunpack.c.l.b16 %v1548
    %v1694 = vunpack.c.h.b16 %v1548
    %v1695 = vunpack.c.l.b16 %v1549
    %v1696 = vunpack.c.h.b16 %v1549
    %v1697 = vunpack.c.l.b16 %v1550
    %v1698 = vunpack.c.h.b16 %v1550
    %v1699 = vunpack.c.l.b16 %v1551
    %v1700 = vunpack.c.h.b16 %v1551
    %v1701 = vunpack.c.l.b16 %v1552
    %v1702 = vunpack.c.h.b16 %v1552
    %v1703 = vunpack.c.l.b16 %v1553
    %v1704 = vunpack.c.h.b16 %v1553
    %v1705 = vunpack.c.l.b16 %v1554
    %v1706 = vunpack.c.h.b16 %v1554
    %v1707 = vunpack.c.l.b16 %v1555
    %v1708 = vunpack.c.h.b16 %v1555
    %v1709 = vunpack.c.l.b16 %v1556
    %v1710 = vunpack.c.h.b16 %v1556
    %v1711 = vunpack.c.l.b16 %v1557
    %v1712 = vunpack.c.h.b16 %v1557
    %v1713 = vunpack.c.l.b16 %v1558
    %v1714 = vunpack.c.h.b16 %v1558
    %v1715 = vunpack.c.l.b16 %v1559
    %v1716 = vunpack.c.h.b16 %v1559
    %v1717 = vunpack.c.l.b16 %v1560
    %v1718 = vunpack.c.h.b16 %v1560
    %v1719 = vunpack.c.l.b16 %v1561
    %v1720 = vunpack.c.h.b16 %v1561
    %v1721 = vunpack.c.l.b16 %v1562
    %v1722 = vunpack.c.h.b16 %v1562
    %v1723 = vunpack.c.l.b16 %v1563
    %v1724 = vunpack.c.h.b16 %v1563
    %v1725 = vunpack.c.l.b16 %v1564
    %v1726 = vunpack.c.h.b16 %v1564
    %v1727 = vunpack.c.l.b16 %v1565
    %v1728 = vunpack.c.h.b16 %v1565
    %v1729 = vunpack.c.l.b16 %v1566
    %v1730 = vunpack.c.h.b16 %v1566
    %v1731 = vunpack.c.l.b16 %v1567
    %v1732 = vunpack.c.h.b16 %v1567
    %v1733 = vunpack.c.l.b16 %v1568
    %v1734 = vunpack.c.h.b16 %v1568
    %v1735 = vunpack.c.l.b16 %v1569
    %v1736 = vunpack.c.h.b16 %v1569
    %v1737 = vunpack.c.l.b16 %v1570
    %v1738 = vunpack.c.h.b16 %v1570
    %v1739 = vunpack.c.l.b16 %v1571
    %v1740 = vunpack.c.h.b16 %v1571
    %v1741 = vunpack.c.l.b16 %v1572
    %v1742 = vunpack.c.h.b16 %v1572
    %v1743 = vunpack.c.l.b16 %v1573
    %v1744 = vunpack.c.h.b16 %v1573
    %v1745 = vunpack.c.l.b16 %v1574
    %v1746 = vunpack.c.h.b16 %v1574
    %v1747 = vunpack.c.l.b16 %v1575
    %v1748 = vunpack.c.h.b16 %v1575
    %v1749 = vunpack.c.l.b16 %v1576
    %v1750 = vunpack.c.h.b16 %v1576
    %v1751 = vunpack.c.l.b16 %v1577
    %v1752 = vunpack.c.h.b16 %v1577
    %v1753 = vunpack.c.l.b16 %v1578
    %v1754 = vunpack.c.h.b16 %v1578
    %v1755 = vunpack.c.l.b16 %v1579
    %v1756 = vunpack.c.h.b16 %v1579
    %v1757 = vunpack.c.l.b16 %v1580
    %v1758 = vunpack.c.h.b16 %v1580
    %v1759 = vunpack.c.l.b16 %v1581
    %v1760 = vunpack.c.h.b16 %v1581
    %v1761 = vunpack.c.l.b16 %v1582
    %v1762 = vunpack.c.h.b16 %v1582
    %v1763 = vunpack.c.l.b16 %v1583
    %v1764 = vunpack.c.h.b16 %v1583
    %v1765 = vunpack.c.l.b16 %v1584
    %v1766 = vunpack.c.h.b16 %v1584
    %v1767 = vunpack.c.l.b16 %v1585
    %v1768 = vunpack.c.h.b16 %v1585
    %v1769 = vunpack.c.l.b16 %v1586
    %v1770 = vunpack.c.h.b16 %v1586
    %v1771 = vunpack.c.l.b16 %v1587
    %v1772 = vunpack.c.h.b16 %v1587
    %v1773 = vunpack.c.l.b16 %v1588
    %v1774 = vunpack.c.h.b16 %v1588
    %v1775 = vunpack.c.l.b16 %v1589
    %v1776 = vunpack.c.h.b16 %v1589
    %v1777 = vunpack.c.l.b16 %v1590
    %v1778 = vunpack.c.h.b16 %v1590
    %v1779 = vunpack.c.l.b16 %v1591
    %v1780 = vunpack.c.h.b16 %v1591
    %v1781 = vunpack.c.l.b16 %v1592
    %v1782 = vunpack.c.h.b16 %v1592
    %v1783 = vunpack.c.l.b16 %v1593
    %v1784 = vunpack.c.h.b16 %v1593
    %v1785 = vunpack.c.l.b16 %v1594
    %v1786 = vunpack.c.h.b16 %v1594
    %v1787 = vunpack.c.l.b16 %v1595
    %v1788 = vunpack.c.h.b16 %v1595
    %v1789 = vunpack.c.l.b16 %v1596
    %v1790 = vunpack.c.h.b16 %v1596
    %v1791 = vunpack.c.l.b16 %v1597
    %v1792 = vunpack.c.h.b16 %v1597
    %v1793 = vunpack.c.l.b16 %v1598
    %v1794 = vunpack.c.h.b16 %v1598
    %v1795 = vunpack.c.l.b16 %v1599
    %v1796 = vunpack.c.h.b16 %v1599
    %v1797 = vunpack.c.l.b16 %v1600
    %v1798 = vunpack.c.h.b16 %v1600
    %v1799 = vunpack.c.l.b16 %v1601
    %v1800 = vunpack.c.h.b16 %v1601
    %v1801 = vunpack.c.l.b16 %v1602
    %v1802 = vunpack.c.h.b16 %v1602
    %v1803 = vunpack.c.l.b16 %v1603
    %v1804 = vunpack.c.h.b16 %v1603
    %v1805 = vunpack.c.l.b16 %v1604
    %v1806 = vunpack.c.h.b16 %v1604
    %v1807 = vunpack.c.l.b16 %v1605
    %v1808 = vunpack.c.h.b16 %v1605
    %v1809 = vunpack.c.l.b16 %v1606
    %v1810 = vunpack.c.h.b16 %v1606
    %v1811 = vpack.c.b16 %v1685, %v1683
    %v1812 = vpack.c.b16 %v1686, %v1684
    %v1813 = vpack.c.b16 %v1689, %v1687
    %v1814 = vpack.c.b16 %v1690, %v1688
    %v1815 = vpack.c.b16 %v1693, %v1691
    %v1816 = vpack.c.b16 %v1694, %v1692
    %v1817 = vpack.c.b16 %v1697, %v1695
    %v1818 = vpack.c.b16 %v1698, %v1696
    %v1819 = vpack.c.b16 %v1701, %v1699
    %v1820 = vpack.c.b16 %v1702, %v1700
    %v1821 = vpack.c.b16 %v1705, %v1703
    %v1822 = vpack.c.b16 %v1706, %v1704
    %v1823 = vpack.c.b16 %v1709, %v1707
    %v1824 = vpack.c.b16 %v1710, %v1708
    %v1825 = vpack.c.b16 %v1713, %v1711
    %v1826 = vpack.c.b16 %v1714, %v1712
    %v1827 = vpack.c.b16 %v1717, %v1715
    %v1828 = vpack.c.b16 %v1718, %v1716
    %v1829 = vpack.c.b16 %v1721, %v1719
    %v1830 = vpack.c.b16 %v1722, %v1720
    %v1831 = vpack.c.b16 %v1725, %v1723
    %v1832 = vpack.c.b16 %v1726, %v1724
    %v1833 = vpack.c.b16 %v1729, %v1727
    %v1834 = vpack.c.b16 %v1730, %v1728
    %v1835 = vpack.c.b16 %v1733, %v1731
    %v1836 = vpack.c.b16 %v1734, %v1732
    %v1837 = vpack.c.b16 %v1737, %v1735
    %v1838 = vpack.c.b16 %v1738, %v1736
    %v1839 = vpack.c.b16 %v1741, %v1739
    %v1840 = vpack.c.b16 %v1742, %v1740
    %v1841 = vpack.c.b16 %v1745, %v1743
    %v1842 = vpack.c.b16 %v1746, %v1744
    %v1843 = vpack.c.b16 %v1749, %v1747
    %v1844 = vpack.c.b16 %v1750, %v1748
    %v1845 = vpack.c.b16 %v1753, %v1751
    %v1846 = vpack.c.b16 %v1754, %v1752
    %v1847 = vpack.c.b16 %v1757, %v1755
    %v1848 = vpack.c.b16 %v1758, %v1756
    %v1849 = vpack.c.b16 %v1761, %v1759
    %v1850 = vpack.c.b16 %v1762, %v1760
    %v1851 = vpack.c.b16 %v1765, %v1763
    %v1852 = vpack.c.b16 %v1766, %v1764
    %v1853 = vpack.c.b16 %v1769, %v1767
    %v1854 = vpack.c.b16 %v1770, %v1768
    %v1855 = vpack.c.b16 %v1773, %v1771
    %v1856 = vpack.c.b16 %v1774, %v1772
    %v1857 = vpack.c.b16 %v1777, %v1775
    %v1858 = vpack.c.b16 %v1778, %v1776
    %v1859 = vpack.c.b16 %v1781, %v1779
    %v1860 = vpack.c.b16 %v1782, %v1780
    %v1861 = vpack.c.b16 %v1785, %v1783
    %v1862 = vpack.c.b16 %v1786, %v1784
    %v1863 = vpack.c.b16 %v1789, %v1787
    %v1864 = vpack.c.b16 %v1790, %v1788
    %v1865 = vpack.c.b16 %v1793, %v1791
    %v1866 = vpack.c.b16 %v1794, %v1792
    %v1867 = vpack.c.b16 %v1797, %v1795
    %v1868 = vpack.c.b16 %v1798, %v1796
    %v1869 = vpack.c.b16 %v1801, %v1799
    %v1870 = vpack.c.b16 %v1802, %v1800
    %v1871 = vpack.c.b16 %v1805, %v1803
    %v1872 = vpack.c.b16 %v1806, %v1804
    %v1873 = vpack.c.b16 %v1809, %v1807
    %v1874 = vpack.c.b16 %v1810, %v1808
    %1939 = vmatprep.subr.bf16.mxu0 %v1826
    %1940 = vmatpush1.bf16.msra.mxu0 %v1825
    %1941 = vmatprep.subr.bf16.mxu0 %v1824
    %1942 = vmatpush1.bf16.msra.mxu0 %v1823
    %1943 = vmatprep.subr.bf16.mxu0 %v1822
    %1944 = vmatpush1.bf16.msra.mxu0 %v1821
    %1945 = vmatprep.subr.bf16.mxu0 %v1820
    %1946 = vmatpush1.bf16.msra.mxu0 %v1819
    %1947 = vmatprep.subr.bf16.mxu0 %v1818
    %1948 = vmatpush1.bf16.msra.mxu0 %v1817
    %1949 = vmatprep.subr.bf16.mxu0 %v1816
    %1950 = vmatpush1.bf16.msra.mxu0 %v1815
    %1951 = vmatprep.subr.bf16.mxu0 %v1814
    %1952 = vmatpush1.bf16.msra.mxu0 %v1813
    %1953 = vmatprep.subr.bf16.mxu0 %v1812
    %1954 = vmatpush1.bf16.msra.mxu0 %v1811
    %1955 = vmatprep.subr.bf16.mxu0 %v1842
    %1956 = vmatpush2.bf16.msra.mxu0 %v1841
    %1957 = vmatprep.subr.bf16.mxu0 %v1840
    %1958 = vmatpush2.bf16.msra.mxu0 %v1839
    %1959 = vmatprep.subr.bf16.mxu0 %v1838
    %1960 = vmatpush2.bf16.msra.mxu0 %v1837
    %1961 = vmatprep.subr.bf16.mxu0 %v1836
    %1962 = vmatpush2.bf16.msra.mxu0 %v1835
    %1963 = vmatprep.subr.bf16.mxu0 %v1834
    %1964 = vmatpush2.bf16.msra.mxu0 %v1833
    %1965 = vmatprep.subr.bf16.mxu0 %v1832
    %1966 = vmatpush2.bf16.msra.mxu0 %v1831
    %1967 = vmatprep.subr.bf16.mxu0 %v1830
    %1968 = vmatpush2.bf16.msra.mxu0 %v1829
    %1969 = vmatprep.subr.bf16.mxu0 %v1828
    %1970 = vmatpush2.bf16.msra.mxu0 %v1827
    %1971 = vmatprep.mubr.bf16.mxu0 %v1540
    %1972 = vmatmul.mubr.bf16.gmra.mxu0 %v1539
    %v1973 = vpop.f32.mrf.mxu0
    %v1974 = vadd.f32 %v1612, %v1973
    %v1975 = vpop.f32.mrf.mxu0
    %v1976 = vadd.f32 %v1616, %v1975
    %v1977 = vpop.f32.mrf.mxu0
    %v1978 = vpop.f32.mrf.mxu0
    %1979 = vdwg.mxu0
    %1980 = vmatprep.subr.bf16.mxu0 %v1858
    %1981 = vmatpush1.bf16.msra.mxu0 %v1857
    %1982 = vmatprep.subr.bf16.mxu0 %v1856
    %1983 = vmatpush1.bf16.msra.mxu0 %v1855
    %1984 = vmatprep.subr.bf16.mxu0 %v1854
    %1985 = vmatpush1.bf16.msra.mxu0 %v1853
    %1986 = vmatprep.subr.bf16.mxu0 %v1852
    %1987 = vmatpush1.bf16.msra.mxu0 %v1851
    %1988 = vmatprep.subr.bf16.mxu0 %v1850
    %1989 = vmatpush1.bf16.msra.mxu0 %v1849
    %1990 = vmatprep.subr.bf16.mxu0 %v1848
    %1991 = vmatpush1.bf16.msra.mxu0 %v1847
    %1992 = vmatprep.subr.bf16.mxu0 %v1846
    %1993 = vmatpush1.bf16.msra.mxu0 %v1845
    %1994 = vmatprep.subr.bf16.mxu0 %v1844
    %1995 = vmatpush1.bf16.msra.mxu0 %v1843
    %1996 = vmatprep.subr.bf16.mxu0 %v1874
    %1997 = vmatpush2.bf16.msra.mxu0 %v1873
    %1998 = vmatprep.subr.bf16.mxu0 %v1872
    %1999 = vmatpush2.bf16.msra.mxu0 %v1871
    %2000 = vmatprep.subr.bf16.mxu0 %v1870
    %2001 = vmatpush2.bf16.msra.mxu0 %v1869
    %2002 = vmatprep.subr.bf16.mxu0 %v1868
    %2003 = vmatpush2.bf16.msra.mxu0 %v1867
    %2004 = vmatprep.subr.bf16.mxu0 %v1866
    %2005 = vmatpush2.bf16.msra.mxu0 %v1865
    %2006 = vmatprep.subr.bf16.mxu0 %v1864
    %2007 = vmatpush2.bf16.msra.mxu0 %v1863
    %2008 = vmatprep.subr.bf16.mxu0 %v1862
    %2009 = vmatpush2.bf16.msra.mxu0 %v1861
    %2010 = vmatprep.subr.bf16.mxu0 %v1860
    %2011 = vmatpush2.bf16.msra.mxu0 %v1859
    %2012 = vmatprep.mubr.bf16.mxu0 %v1542
    %2013 = vmatmul.mubr.bf16.gmra.mxu0 %v1541
    %v2014 = vpop.f32.mrf.mxu0
    %v2015 = vadd.f32 %v1974, %v2014
    %v2016 = vpop.f32.mrf.mxu0
    %v2017 = vadd.f32 %v1976, %v2016
    %v2018 = vpop.f32.mrf.mxu0
    %v2019 = vpop.f32.mrf.mxu0
    %2020 = vdwg.mxu0
    %v2021 = vmax.f32 %v2015, 0.0
    %v2022 = vmax.f32 %v2017, 0.0
    %v2023 = vpack.c.bf16 %v2021, %v2021
    %v2024 = vpack.c.bf16 %v2022, %v2022
    %v2025 = vld [vmem:[#allocation10] sm:$0xf]
    %v2026 = vld [vmem:[#allocation10 + $0x4] sm:$0xf]
    %v2027 = vld [vmem:[#allocation10 + $0x8] sm:$0xf]
    %v2028 = vld [vmem:[#allocation10 + $0xc] sm:$0xf]
    %v2029 = vld [vmem:[#allocation10 + $0x10] sm:$0xf]
    %v2030 = vld [vmem:[#allocation10 + $0x14] sm:$0xf]
    %v2031 = vld [vmem:[#allocation10 + $0x18] sm:$0xf]
    %v2032 = vld [vmem:[#allocation10 + $0x1c] sm:$0xf]
    %v2033 = vld [vmem:[#allocation10 + $0x20] sm:$0xf]
    %v2034 = vld [vmem:[#allocation10 + $0x24] sm:$0xf]
    %v2035 = vld [vmem:[#allocation10 + $0x28] sm:$0xf]
    %v2036 = vld [vmem:[#allocation10 + $0x2c] sm:$0xf]
    %v2037 = vld [vmem:[#allocation10 + $0x30] sm:$0xf]
    %v2038 = vld [vmem:[#allocation10 + $0x34] sm:$0xf]
    %v2039 = vld [vmem:[#allocation10 + $0x38] sm:$0xf]
    %v2040 = vld [vmem:[#allocation10 + $0x3c] sm:$0xf]
    %v2041 = vld [vmem:[#allocation10 + $0x40] sm:$0xf]
    %v2042 = vld [vmem:[#allocation10 + $0x44] sm:$0xf]
    %v2043 = vld [vmem:[#allocation10 + $0x48] sm:$0xf]
    %v2044 = vld [vmem:[#allocation10 + $0x4c] sm:$0xf]
    %v2045 = vld [vmem:[#allocation10 + $0x50] sm:$0xf]
    %v2046 = vld [vmem:[#allocation10 + $0x54] sm:$0xf]
    %v2047 = vld [vmem:[#allocation10 + $0x58] sm:$0xf]
    %v2048 = vld [vmem:[#allocation10 + $0x5c] sm:$0xf]
    %v2049 = vld [vmem:[#allocation10 + $0x60] sm:$0xf]
    %v2050 = vld [vmem:[#allocation10 + $0x64] sm:$0xf]
    %v2051 = vld [vmem:[#allocation10 + $0x68] sm:$0xf]
    %v2052 = vld [vmem:[#allocation10 + $0x6c] sm:$0xf]
    %v2053 = vld [vmem:[#allocation10 + $0x70] sm:$0xf]
    %v2054 = vld [vmem:[#allocation10 + $0x74] sm:$0xf]
    %v2055 = vld [vmem:[#allocation10 + $0x78] sm:$0xf]
    %v2056 = vld [vmem:[#allocation10 + $0x7c] sm:$0xf]
    %v2057 = vld [vmem:[%s6] sm:$0x1]
    %v2059 = vlaneseq
    %v2060 = vshrl.u32 %v2059, 7
    %v2061 = vsub.s32 0, %v2060
    %v2062 = vrot.slane %v2057, %v2061
    %v2096 = vunpack.c.l.b16 %v2025
    %v2097 = vunpack.c.l.b16 %v2026
    %v2098 = vunpack.c.l.b16 %v2027
    %v2099 = vunpack.c.l.b16 %v2028
    %v2100 = vunpack.c.l.b16 %v2029
    %v2101 = vunpack.c.l.b16 %v2030
    %v2102 = vunpack.c.l.b16 %v2031
    %v2103 = vunpack.c.l.b16 %v2032
    %v2104 = vunpack.c.l.b16 %v2033
    %v2105 = vunpack.c.l.b16 %v2034
    %v2106 = vunpack.c.l.b16 %v2035
    %v2107 = vunpack.c.l.b16 %v2036
    %v2108 = vunpack.c.l.b16 %v2037
    %v2109 = vunpack.c.l.b16 %v2038
    %v2110 = vunpack.c.l.b16 %v2039
    %v2111 = vunpack.c.l.b16 %v2040
    %v2112 = vunpack.c.l.b16 %v2041
    %v2113 = vunpack.c.l.b16 %v2042
    %v2114 = vunpack.c.l.b16 %v2043
    %v2115 = vunpack.c.l.b16 %v2044
    %v2116 = vunpack.c.l.b16 %v2045
    %v2117 = vunpack.c.l.b16 %v2046
    %v2118 = vunpack.c.l.b16 %v2047
    %v2119 = vunpack.c.l.b16 %v2048
    %v2120 = vunpack.c.l.b16 %v2049
    %v2121 = vunpack.c.l.b16 %v2050
    %v2122 = vunpack.c.l.b16 %v2051
    %v2123 = vunpack.c.l.b16 %v2052
    %v2124 = vunpack.c.l.b16 %v2053
    %v2125 = vunpack.c.l.b16 %v2054
    %v2126 = vunpack.c.l.b16 %v2055
    %v2127 = vunpack.c.l.b16 %v2056
    %v2128 = vpack.c.b16 %v2097, %v2096
    %v2129 = vpack.c.b16 %v2099, %v2098
    %v2130 = vpack.c.b16 %v2101, %v2100
    %v2131 = vpack.c.b16 %v2103, %v2102
    %v2132 = vpack.c.b16 %v2105, %v2104
    %v2133 = vpack.c.b16 %v2107, %v2106
    %v2134 = vpack.c.b16 %v2109, %v2108
    %v2135 = vpack.c.b16 %v2111, %v2110
    %v2136 = vpack.c.b16 %v2113, %v2112
    %v2137 = vpack.c.b16 %v2115, %v2114
    %v2138 = vpack.c.b16 %v2117, %v2116
    %v2139 = vpack.c.b16 %v2119, %v2118
    %v2140 = vpack.c.b16 %v2121, %v2120
    %v2141 = vpack.c.b16 %v2123, %v2122
    %v2142 = vpack.c.b16 %v2125, %v2124
    %v2143 = vpack.c.b16 %v2127, %v2126
    %2160 = vmatprep.subr.bf16.mxu0 0
    %2161 = vmatpush1.bf16.msra.mxu0 %v2135
    %2162 = vmatprep.subr.bf16.mxu0 0
    %2163 = vmatpush1.bf16.msra.mxu0 %v2134
    %2164 = vmatprep.subr.bf16.mxu0 0
    %2165 = vmatpush1.bf16.msra.mxu0 %v2133
    %2166 = vmatprep.subr.bf16.mxu0 0
    %2167 = vmatpush1.bf16.msra.mxu0 %v2132
    %2168 = vmatprep.subr.bf16.mxu0 0
    %2169 = vmatpush1.bf16.msra.mxu0 %v2131
    %2170 = vmatprep.subr.bf16.mxu0 0
    %2171 = vmatpush1.bf16.msra.mxu0 %v2130
    %2172 = vmatprep.subr.bf16.mxu0 0
    %2173 = vmatpush1.bf16.msra.mxu0 %v2129
    %2174 = vmatprep.subr.bf16.mxu0 0
    %2175 = vmatpush1.bf16.msra.mxu0 %v2128
    %2176 = vmatprep.subr.bf16.mxu0 0
    %2177 = vmatpush2.bf16.msra.mxu0 %v2143
    %2178 = vmatprep.subr.bf16.mxu0 0
    %2179 = vmatpush2.bf16.msra.mxu0 %v2142
    %2180 = vmatprep.subr.bf16.mxu0 0
    %2181 = vmatpush2.bf16.msra.mxu0 %v2141
    %2182 = vmatprep.subr.bf16.mxu0 0
    %2183 = vmatpush2.bf16.msra.mxu0 %v2140
    %2184 = vmatprep.subr.bf16.mxu0 0
    %2185 = vmatpush2.bf16.msra.mxu0 %v2139
    %2186 = vmatprep.subr.bf16.mxu0 0
    %2187 = vmatpush2.bf16.msra.mxu0 %v2138
    %2188 = vmatprep.subr.bf16.mxu0 0
    %2189 = vmatpush2.bf16.msra.mxu0 %v2137
    %2190 = vmatprep.subr.bf16.mxu0 0
    %2191 = vmatpush2.bf16.msra.mxu0 %v2136
    %2192 = vmatprep.mubr.bf16.mxu0 %v2024
    %2193 = vmatmul.mubr.bf16.gmra.mxu0 %v2023
    %v2194 = vpop.f32.mrf.mxu0
    %v2195 = vadd.f32 %v2062, %v2194
    %v2196 = vpop.f32.mrf.mxu0
    %v2197 = vpop.f32.mrf.mxu0
    %v2198 = vpop.f32.mrf.mxu0
    %2199 = vdwg.mxu0
    %2200 = vst [vmem:[%s7] sm:$0xff] %v2195
    // Predicated region
    $region54: #{clinicalbert_classifier_forward.1} parent=1 // pred_check
      _
    $region55: #{clinicalbert_classifier_forward.1} parent=1 // pred_check_branch
      %2202 = sbr.rel (0) target = $region57
    $region56: #{clinicalbert_classifier_forward.1} parent=1 // pred_region
      _
    $region57: #{clinicalbert_classifier_forward.1} parent=1 // pred_fallthru
      _
    // Predicated region
    $region58: #{clinicalbert_classifier_forward.1} parent=1 // pred_check
      _
    $region59: #{clinicalbert_classifier_forward.1} parent=1 // pred_check_branch
      %2204 = sbr.rel (0) target = $region61
    $region60: #{clinicalbert_classifier_forward.1} parent=1 // pred_region
      _
    $region61: #{clinicalbert_classifier_forward.1} parent=1 // pred_fallthru
      _
    %2205 = vsyncpa [#allocation3], 1
    %2206 = vsyncpa [#allocation5], 1
    %2207 = vsyncpa [#allocation8], 1
    %2208 = vsyncpa [#allocation11], 1

</llo_original>
